<compile_context>
chip_gen: v7x
topology: tpu7x:2x2x1
jax: 0.10.0
libtpu: 0.0.40
codegen_flags: <defaults>
</compile_context>

<pallas_src>
import functools

import numpy as np
import jax
import jax.numpy as jnp
from jax.experimental import pallas as pl
from jax.experimental.pallas import tpu as pltpu

_H = 15
_W = 15
_L = 11
_TL = 198 * 128  # 25344 lanes per block -> >= 2 lane blocks over 50625 (megacore)


def _build_mask_flat(h: int = _H, w: int = _W, l: int = _L) -> np.ndarray:
    """Mask flattened in NC(HW) order: m[0, c*h*w + i*w + j] = mask[i, j, c]."""
    c = np.arange(h * w)
    tc = c // w                                    # c // 15
    tr = c % w                                     # c % 15
    i = np.arange(h)
    j = np.arange(w)
    m = (np.abs(tc[:, None, None] - j[None, None, :]) <= l) & \
        (np.abs(tr[:, None, None] - i[None, :, None]) <= l)        # (C, H, W)
    return m.reshape(1, h * w * h * w)                              # (1, C*H*W) bool


_MASK_FLAT = _build_mask_flat()


def _mask_kernel(x_ref, m_ref, o_ref):
    # x_ref / o_ref: (TB, TL); m_ref: (1, TL) sublane-broadcast over the TB rows.
    # DMA-bound by ~10x on all generations -> no compute-side micro-optimization.
    o_ref[...] = x_ref[...] * m_ref[...]


@functools.partial(jax.jit, static_argnames=("in_place",))
def feature_masking(x: jnp.ndarray, in_place: bool = False) -> jnp.ndarray:
    """x: (B, C, H, W) with H=W=15, C=225. Returns x * mask (same shape/dtype)."""
    B, C, H, W = x.shape
    assert H == _H and W == _W and C == H * W, "FeatureMasking hardcodes h=w=15, C=225"
    CHW = C * H * W                                   # 50625
    itemsize = jnp.dtype(x.dtype).itemsize

    mask_flat = jnp.asarray(_MASK_FLAT, dtype=x.dtype)      # constant-folded under jit
    x_flat = x.reshape(B, CHW)   # should lower to a bitcast; verify in HLO (see header)

    # Rows per batch block: multiple of the native sublane packing
    # (8 f32 / 16 bf16 / 32 int8-fp8), capped so one x block is ~3.2 MB.
    pack = max(1, 4 // itemsize)
    row_mult = 8 * pack
    if B <= row_mult:
        TB = B                                        # full-dim block is always legal
    else:
        TB = min(32 * pack, (B // row_mult) * row_mult)
    TL = min(_TL, CHW)
    grid = (pl.cdiv(B, TB), pl.cdiv(CHW, TL))

    # Explicit VMEM budget: in + out double-buffered + double-buffered mask block,
    # plus headroom.  ~13 MB at the f32 cap (TB=32): under v5e's 16 MiB scoped
    # default once raised here, and well under v6e/v7x budgets.
    vmem_bytes = 2 * 2 * TB * TL * itemsize + 2 * TL * itemsize
    vmem_limit = max(int(1.5 * vmem_bytes) + (1 << 20), 4 << 20)

    out_flat = pl.pallas_call(
        _mask_kernel,
        out_shape=jax.ShapeDtypeStruct((B, CHW), x.dtype),
        grid=grid,
        in_specs=[
            pl.BlockSpec((TB, TL), lambda b, l: (b, l)),
            pl.BlockSpec((1, TL), lambda b, l: (0, l)),   # mask streamed per lane block
        ],
        out_specs=pl.BlockSpec((TB, TL), lambda b, l: (b, l)),
        compiler_params=pltpu.CompilerParams(
            dimension_semantics=("parallel", "parallel"),  # both TCs busy on v7x
            vmem_limit_bytes=vmem_limit,
        ),
        cost_estimate=pl.CostEstimate(
            flops=B * CHW,
            bytes_accessed=(2 * B + 1) * CHW * itemsize,
            transcendentals=0,
        ),
        input_output_aliases={0: 0} if in_place else {},
    )(x_flat, mask_flat)

    return out_flat.reshape(B, C, H, W)


if __name__ == "__main__":
    key = jax.random.PRNGKey(0)
    B, H, W = 2, _H, _W
    C = H * W
    x = jax.random.normal(key, (B, C, H, W), dtype=jnp.float32)

    out = jax.block_until_ready(feature_masking(x))
    out_inplace = jax.block_until_ready(feature_masking(x, in_place=True))

    # Pure-numpy reference (same math as the PyTorch module, NHWC mask layout).
    c = np.arange(C)
    mask_hwc = (
        (np.abs(c[None, None, :] // W - np.arange(W)[None, :, None]) <= _L)
        & (np.abs(c[None, None, :] % W - np.arange(H)[:, None, None]) <= _L)
    ).astype(np.float32)                                            # (H, W, C)
    ref = np.transpose(
        np.transpose(np.asarray(x), (0, 2, 3, 1)) * mask_hwc[None, ...],
        (0, 3, 1, 2),
    )

    assert out.shape == x.shape and out.dtype == x.dtype
    np.testing.assert_array_equal(np.asarray(out), ref)
    np.testing.assert_array_equal(np.asarray(out_inplace), ref)
    print("KERNEL_OK")
</pallas_src>

<mosaic_0001>
module attributes {stable_mosaic.version = 11 : i64} {
  func.func @_mask_kernel(%arg0: i32, %arg1: i32, %arg2: memref<2x25344xf32, #tpu.memory_space<vmem>>, %arg3: memref<1x25344xf32, #tpu.memory_space<vmem>>, %arg4: memref<2x25344xf32, #tpu.memory_space<vmem>>) attributes {dimension_semantics = [#tpu.dimension_semantics<parallel>, #tpu.dimension_semantics<parallel>], iteration_bounds = array<i64: 1, 2>, scalar_prefetch = 0 : i64, scratch_operands = 0 : i64, tpu.core_type = #tpu.core_type<tc>, window_params = [{transform_indices = @transform_0, window_bounds = array<i64: 2, 25344>}, {transform_indices = @transform_1, window_bounds = array<i64: 1, 25344>}, {transform_indices = @transform_2, window_bounds = array<i64: 2, 25344>}]} {
    %c0 = arith.constant 0 : index
    %c0_0 = arith.constant 0 : index
    %0 = vector.load %arg2[%c0, %c0_0] : memref<2x25344xf32, #tpu.memory_space<vmem>>, vector<2x25344xf32>
    %c0_1 = arith.constant 0 : index
    %c0_2 = arith.constant 0 : index
    %1 = vector.load %arg3[%c0_1, %c0_2] : memref<1x25344xf32, #tpu.memory_space<vmem>>, vector<1x25344xf32>
    %2 = vector.broadcast %1 : vector<1x25344xf32> to vector<2x25344xf32>
    %3 = arith.mulf %0, %2 : vector<2x25344xf32>
    %c0_3 = arith.constant 0 : index
    %c0_4 = arith.constant 0 : index
    %4 = vector.load %arg4[%c0_3, %c0_4] : memref<2x25344xf32, #tpu.memory_space<vmem>>, vector<2x25344xf32>
    tpu.vector_store %arg4[%c0_3, %c0_4], %3 {strides = array<i32>} : memref<2x25344xf32, #tpu.memory_space<vmem>>, vector<2x25344xf32>,
    return
  }
  func.func @transform_0(%arg0: i32, %arg1: i32) -> (i32, i32) {
    %c0_i32 = arith.constant 0 : i32
    return %arg0, %arg1 : i32, i32
  }
  func.func @transform_1(%arg0: i32, %arg1: i32) -> (i32, i32) {
    %c0_i32 = arith.constant 0 : i32
    %c0_i32_0 = arith.constant 0 : i32
    return %c0_i32, %arg1 : i32, i32
  }
  func.func @transform_2(%arg0: i32, %arg1: i32) -> (i32, i32) {
    %c0_i32 = arith.constant 0 : i32
    return %arg0, %arg1 : i32, i32
  }
}

</mosaic_0001>

<llo_original>
// kernel: feature_masking.1
$region0: #{feature_masking.1}
  #allocation0 [shape = 'u32[]', space=smem, size = 0x4, offset = 0x4, fixed_abs, tag = 'smem constant byte address 0x4 - core index']
  #allocation1 [shape = 'u32[144,128]{1,0:T(1,128)}', space=vmem, size = 0x12000, scoped, tag = 'internal scratch']
  %s0 = inlined_call_operand.vmem [shape: f32[2,50625], index: 0, kind: input, shape index: {}]
  %s1 = inlined_call_operand.vmem [shape: f32[1,50625], index: 1, kind: input, shape index: {}]
  %s2 = inlined_call_operand.vmem [shape: f32[2,50625], index: 2, kind: output, shape index: {}]
  %s3 = sld [smem:[#allocation0]]
  $region41: #{feature_masking.1} parent=0
    _
  %s5 = ssub.s32 1, %s3
  %s6 = scalar_select 0, %s5, %s3
  loop: start=0, step=1, limit=4
  $region2: #{feature_masking.1} parent=0 // loop_pre_header
    _
  $region3: #{feature_masking.1} parent=0 // loop_header
    %s8 = sphi 0, %s12
    %p9 = scmp.ge.s32.totalorder %s8, 4
    %s15 = sphi 0, %s27
    %s16 = sphi 0, %s23
    %s17 = sphi 0, %s15
    %s18 = sphi 0, %s16
    %s19 = sphi 0, %s17
    %s20 = sphi 0, %s18
    %s32 = sphi 0, %s34
    %s35 = sphi 0, %s32
    %s36 = sphi 0, %s35
    %s52 = sphi 0, %s36
    %s58 = sphi 0, %s60
    %s61 = sphi 0, %s58
    %s62 = sphi 0, %s61
    %s78 = sphi 0, %s62
    %s86 = sphi 0, %s88
    %s89 = sphi 0, %s86
    %s90 = sphi 0, %s89
    %s106 = sphi 0, %s90
  $region4: #{feature_masking.1} parent=0 // loop_header_branch
    %11 = sbr.rel (%p9) target = $region8
  $region5: #{feature_masking.1} parent=0 // loop_body
    %s13 = ssub.s32 %s8, 1
    %s14 = ssub.s32 %s8, 2
    %s21 = sadd.s32 1, %s16
    %p22 = scmp.ge.s32.totalorder %s21, 2
    %s23 = scalar_select %p22, 0, %s21
    %s24 = sadd.s32 1, %s15
    %s25 = scalar_select %p22, %s24, %s15
    %p26 = scmp.ge.s32.totalorder %s25, 1
    %s27 = scalar_select %p26, 0, %s25
    %s28 = ssub.s32 %s15, %s27
    %s29 = ssub.s32 %s16, %s23
    %s30 = sor.u32 %s28, %s29
    %p31 = scmp.eq.s32.totalorder %s30, 0
    %s33 = sadd.s32 %s32, 1
    %s34 = scalar_select %p31, %s32, %s33
    %p37 = pneg %p31
    %p38 = scmp.eq.s32.totalorder %s8, 1
    %p39 = por %p37, %p38
    %p40 = scmp.ne.s32.totalorder %s32, %s35
    %p41 = scmp.eq.s32.totalorder %s8, 0
    %p42 = por %p40, %p41
    %p43 = scmp.ne.s32.totalorder %s32, %s35
    %p44 = scmp.eq.s32.totalorder %s13, 1
    %p45 = por %p43, %p44
    %p46 = scmp.ne.s32.totalorder %s35, %s36
    %p47 = scmp.eq.s32.totalorder %s13, 0
    %p48 = por %p46, %p47
    %p49 = scmp.ne.s32.totalorder %s35, %s36
    %p50 = scmp.eq.s32.totalorder %s14, 1
    %p51 = por %p49, %p50
    %p53 = scmp.ne.s32.totalorder %s36, %s52
    %p54 = scmp.eq.s32.totalorder %s14, 0
    %p55 = por %p53, %p54
    %s56 = ssub.s32 %s16, %s23
    %p57 = scmp.eq.s32.totalorder %s56, 0
    %s59 = sadd.s32 %s58, 1
    %s60 = scalar_select %p57, %s58, %s59
    %p63 = pneg %p57
    %p64 = scmp.eq.s32.totalorder %s8, 1
    %p65 = por %p63, %p64
    %p66 = scmp.ne.s32.totalorder %s58, %s61
    %p67 = scmp.eq.s32.totalorder %s8, 0
    %p68 = por %p66, %p67
    %p69 = scmp.ne.s32.totalorder %s58, %s61
    %p70 = scmp.eq.s32.totalorder %s13, 1
    %p71 = por %p69, %p70
    %p72 = scmp.ne.s32.totalorder %s61, %s62
    %p73 = scmp.eq.s32.totalorder %s13, 0
    %p74 = por %p72, %p73
    %p75 = scmp.ne.s32.totalorder %s61, %s62
    %p76 = scmp.eq.s32.totalorder %s14, 1
    %p77 = por %p75, %p76
    %p79 = scmp.ne.s32.totalorder %s62, %s78
    %p80 = scmp.eq.s32.totalorder %s14, 0
    %p81 = por %p79, %p80
    %s82 = ssub.s32 %s15, %s27
    %s83 = ssub.s32 %s16, %s23
    %s84 = sor.u32 %s82, %s83
    %p85 = scmp.eq.s32.totalorder %s84, 0
    %s87 = sadd.s32 %s86, 1
    %s88 = scalar_select %p85, %s86, %s87
    %p91 = pneg %p85
    %p92 = scmp.eq.s32.totalorder %s8, 1
    %p93 = por %p91, %p92
    %p94 = scmp.ne.s32.totalorder %s86, %s89
    %p95 = scmp.eq.s32.totalorder %s8, 0
    %p96 = por %p94, %p95
    %p97 = scmp.ne.s32.totalorder %s86, %s89
    %p98 = scmp.eq.s32.totalorder %s13, 1
    %p99 = por %p97, %p98
    %p100 = scmp.ne.s32.totalorder %s89, %s90
    %p101 = scmp.eq.s32.totalorder %s13, 0
    %p102 = por %p100, %p101
    %p103 = scmp.ne.s32.totalorder %s89, %s90
    %p104 = scmp.eq.s32.totalorder %s14, 1
    %p105 = por %p103, %p104
    %p107 = scmp.ne.s32.totalorder %s90, %s106
    %p108 = scmp.eq.s32.totalorder %s14, 0
    %p109 = por %p107, %p108
    %p110 = scmp.le.s32.totalorder 1, %s8
    %p111 = scmp.lt.s32.totalorder %s8, 3
    %p112 = pnand %p110, %p111
    %p113 = pneg %p112
    // Predicated region
    $region9: #{feature_masking.1} parent=5 // pred_check
      _
    $region10: #{feature_masking.1} parent=5 // pred_check_branch
      %115 = sbr.rel (%p112) target = $region12
    $region11: #{feature_masking.1} parent=5 // pred_region
      %s116 = ssub.s32 %s8, 1
    $region12: #{feature_masking.1} parent=5 // pred_fallthru
      _
    %p117 = scmp.lt.s32.totalorder %s8, 2
    // Predicated region
    $region13: #{feature_masking.1} parent=5 // pred_check
      %p118 = pneg %p117
    $region14: #{feature_masking.1} parent=5 // pred_check_branch
      %120 = sbr.rel (%p118) target = $region16
    $region15: #{feature_masking.1} parent=5 // pred_region
      // Predicated region
      $region17: #{feature_masking.1} parent=15 // pred_check
        %p121 = pneg %p42
      $region18: #{feature_masking.1} parent=15 // pred_check_branch
        %123 = sbr.rel (%p121) target = $region20
      $region19: #{feature_masking.1} parent=15 // pred_region
        %s124 = smul.u32 198, %s16
        %p125 = scmp.lt.s32.totalorder %s15, 0
        %s126 = scalar_select %p125, %s15, 0
        %p127 = scmp.lt.s32.totalorder %s124, 395
        %s128 = scalar_select %p127, %s124, 395
        %s129 = smul.addr %s126, 396
        %s130 = sadd.s32 %s128, %s129
        %s131 = smul.addr %s130, 2
        %s132 = scalar_lea.vmem %s0, %s131
        %s133 = smul.u32 198, %s16
      $region20: #{feature_masking.1} parent=15 // pred_fallthru
        _
      // Predicated region
      $region21: #{feature_masking.1} parent=15 // pred_check
        %p134 = pneg %p68
      $region22: #{feature_masking.1} parent=15 // pred_check_branch
        %136 = sbr.rel (%p134) target = $region24
      $region23: #{feature_masking.1} parent=15 // pred_region
        %s137 = smul.u32 198, %s16
        %p138 = scmp.lt.s32.totalorder %s137, 395
        %s139 = scalar_select %p138, %s137, 395
        %s140 = scalar_lea.vmem %s1, %s139
        %s141 = smul.u32 198, %s16
      $region24: #{feature_masking.1} parent=15 // pred_fallthru
        _
    $region16: #{feature_masking.1} parent=5 // pred_fallthru
      _
    %p142 = scmp.le.s32.totalorder 1, %s8
    %p143 = scmp.lt.s32.totalorder %s8, 3
    %p144 = pnand %p142, %p143
    %p145 = pneg %p144
    // Predicated region
    $region25: #{feature_masking.1} parent=5 // pred_check
      _
    $region26: #{feature_masking.1} parent=5 // pred_check_branch
      %147 = sbr.rel (%p144) target = $region28
    $region27: #{feature_masking.1} parent=5 // pred_region
      %s148 = ssub.s32 %s8, 1
      %s149 = smul.u32 198, %s18
      %p150 = scmp.lt.s32.totalorder %s17, 0
      %s151 = scalar_select %p150, %s17, 0
      %p152 = scmp.lt.s32.totalorder %s149, 395
      %s153 = scalar_select %p152, %s149, 395
      %s154 = smul.addr %s151, 396
      %s155 = sadd.s32 %s153, %s154
      %s156 = smul.addr %s155, 2
      %s157 = scalar_lea.vmem %s0, %s156
      %p158 = pneg %p48
      %p159 = pneg %p45
      %s160 = smul.u32 198, %s18
      %p161 = scmp.lt.s32.totalorder %s160, 395
      %s162 = scalar_select %p161, %s160, 395
      %s163 = scalar_lea.vmem %s1, %s162
      %p164 = pneg %p74
      %p165 = pneg %p71
      %p166 = pneg %p102
      %p167 = pneg %p99
      %s168 = smul.u32 198, %s18
      %p169 = scmp.lt.s32.totalorder %s17, 0
      %s170 = scalar_select %p169, %s17, 0
      %p171 = scmp.lt.s32.totalorder %s168, 395
      %s172 = scalar_select %p171, %s168, 395
      %s173 = smul.addr %s170, 396
      %s174 = sadd.s32 %s172, %s173
      %s175 = smul.addr %s174, 2
      %s176 = scalar_lea.vmem %s2, %s175
      %s177 = smul.u32 198, %s18
      %p178 = scmp.lt.s32.totalorder %s17, 0
      %s179 = scalar_select %p178, %s17, 0
      %p180 = scmp.lt.s32.totalorder %s177, 395
      %s181 = scalar_select %p180, %s177, 395
      %s182 = smul.addr %s179, 396
      %s183 = sadd.s32 %s181, %s182
      %s184 = smul.addr %s183, 2
      %s185 = scalar_lea.vmem %s0, %s184
      %s186 = smul.u32 198, %s18
      %s187 = smul.u32 198, %s18
      %p188 = scmp.lt.s32.totalorder %s187, 395
      %s189 = scalar_select %p188, %s187, 395
      %s190 = scalar_lea.vmem %s1, %s189
      %s191 = smul.u32 198, %s18
      %s192 = smul.u32 198, %s18
      %p193 = scmp.lt.s32.totalorder %s17, 0
      %s194 = scalar_select %p193, %s17, 0
      %p195 = scmp.lt.s32.totalorder %s192, 395
      %s196 = scalar_select %p195, %s192, 395
      %s197 = smul.addr %s194, 396
      %s198 = sadd.s32 %s196, %s197
      %s199 = smul.addr %s198, 2
      %s200 = scalar_lea.vmem %s2, %s199
      %s201 = smul.u32 198, %s18
      %v202 = vld [vmem:[%s185] sm:$0xff]
      %v203 = vld [vmem:[%s185 + $0x8] sm:$0xff]
      %v204 = vld [vmem:[%s185 + $0x10] sm:$0xff]
      %v205 = vld [vmem:[%s185 + $0x18] sm:$0xff]
      %v206 = vld [vmem:[%s185 + $0x20] sm:$0xff]
      %v207 = vld [vmem:[%s185 + $0x28] sm:$0xff]
      %v208 = vld [vmem:[%s185 + $0x30] sm:$0xff]
      %v209 = vld [vmem:[%s185 + $0x38] sm:$0xff]
      %v210 = vld [vmem:[%s185 + $0x40] sm:$0xff]
      %v211 = vld [vmem:[%s185 + $0x48] sm:$0xff]
      %v212 = vld [vmem:[%s185 + $0x50] sm:$0xff]
      %v213 = vld [vmem:[%s185 + $0x58] sm:$0xff]
      %v214 = vld [vmem:[%s185 + $0x60] sm:$0xff]
      %v215 = vld [vmem:[%s185 + $0x68] sm:$0xff]
      %v216 = vld [vmem:[%s185 + $0x70] sm:$0xff]
      %v217 = vld [vmem:[%s185 + $0x78] sm:$0xff]
      %v218 = vld [vmem:[%s185 + $0x80] sm:$0xff]
      %v219 = vld [vmem:[%s185 + $0x88] sm:$0xff]
      %v220 = vld [vmem:[%s185 + $0x90] sm:$0xff]
      %v221 = vld [vmem:[%s185 + $0x98] sm:$0xff]
      %v222 = vld [vmem:[%s185 + $0xa0] sm:$0xff]
      %v223 = vld [vmem:[%s185 + $0xa8] sm:$0xff]
      %v224 = vld [vmem:[%s185 + $0xb0] sm:$0xff]
      %v225 = vld [vmem:[%s185 + $0xb8] sm:$0xff]
      %v226 = vld [vmem:[%s185 + $0xc0] sm:$0xff]
      %v227 = vld [vmem:[%s185 + $0xc8] sm:$0xff]
      %v228 = vld [vmem:[%s185 + $0xd0] sm:$0xff]
      %v229 = vld [vmem:[%s185 + $0xd8] sm:$0xff]
      %v230 = vld [vmem:[%s185 + $0xe0] sm:$0xff]
      %v231 = vld [vmem:[%s185 + $0xe8] sm:$0xff]
      %v232 = vld [vmem:[%s185 + $0xf0] sm:$0xff]
      %v233 = vld [vmem:[%s185 + $0xf8] sm:$0xff]
      %v234 = vld [vmem:[%s185 + $0x100] sm:$0xff]
      %v235 = vld [vmem:[%s185 + $0x108] sm:$0xff]
      %v236 = vld [vmem:[%s185 + $0x110] sm:$0xff]
      %v237 = vld [vmem:[%s185 + $0x118] sm:$0xff]
      %v238 = vld [vmem:[%s185 + $0x120] sm:$0xff]
      %v239 = vld [vmem:[%s185 + $0x128] sm:$0xff]
      %v240 = vld [vmem:[%s185 + $0x130] sm:$0xff]
      %v241 = vld [vmem:[%s185 + $0x138] sm:$0xff]
      %v242 = vld [vmem:[%s185 + $0x140] sm:$0xff]
      %v243 = vld [vmem:[%s185 + $0x148] sm:$0xff]
      %v244 = vld [vmem:[%s185 + $0x150] sm:$0xff]
      %v245 = vld [vmem:[%s185 + $0x158] sm:$0xff]
      %v246 = vld [vmem:[%s185 + $0x160] sm:$0xff]
      %v247 = vld [vmem:[%s185 + $0x168] sm:$0xff]
      %v248 = vld [vmem:[%s185 + $0x170] sm:$0xff]
      %v249 = vld [vmem:[%s185 + $0x178] sm:$0xff]
      %v250 = vld [vmem:[%s185 + $0x180] sm:$0xff]
      %v251 = vld [vmem:[%s185 + $0x188] sm:$0xf]
      %v252 = vld [vmem:[%s190] sm:$0xff]
      %v253 = vld [vmem:[%s190 + $0x8] sm:$0xff]
      %v254 = vld [vmem:[%s190 + $0x10] sm:$0xff]
      %v255 = vld [vmem:[%s190 + $0x18] sm:$0xff]
      %v256 = vld [vmem:[%s190 + $0x20] sm:$0xff]
      %v257 = vld [vmem:[%s190 + $0x28] sm:$0xff]
      %v258 = vld [vmem:[%s190 + $0x30] sm:$0xff]
      %v259 = vld [vmem:[%s190 + $0x38] sm:$0xff]
      %v260 = vld [vmem:[%s190 + $0x40] sm:$0xff]
      %v261 = vld [vmem:[%s190 + $0x48] sm:$0xff]
      %v262 = vld [vmem:[%s190 + $0x50] sm:$0xff]
      %v263 = vld [vmem:[%s190 + $0x58] sm:$0xff]
      %v264 = vld [vmem:[%s190 + $0x60] sm:$0xff]
      %v265 = vld [vmem:[%s190 + $0x68] sm:$0xff]
      %v266 = vld [vmem:[%s190 + $0x70] sm:$0xff]
      %v267 = vld [vmem:[%s190 + $0x78] sm:$0xff]
      %v268 = vld [vmem:[%s190 + $0x80] sm:$0xff]
      %v269 = vld [vmem:[%s190 + $0x88] sm:$0xff]
      %v270 = vld [vmem:[%s190 + $0x90] sm:$0xff]
      %v271 = vld [vmem:[%s190 + $0x98] sm:$0xff]
      %v272 = vld [vmem:[%s190 + $0xa0] sm:$0xff]
      %v273 = vld [vmem:[%s190 + $0xa8] sm:$0xff]
      %v274 = vld [vmem:[%s190 + $0xb0] sm:$0xff]
      %v275 = vld [vmem:[%s190 + $0xb8] sm:$0xff]
      %v276 = vld [vmem:[%s190 + $0xc0] sm:$0x3f]
      %v302 = vlaneseq
      %v303 = vshrl.u32 %v302, 7
      %v304 = vsub.s32 0, %v303
      %v305 = vrot.slane %v252, %v304
      %v306 = vlaneseq
      %v307 = vshrl.u32 %v306, 7
      %v308 = vsub.s32 1, %v307
      %v309 = vrot.slane %v252, %v308
      %v310 = vlaneseq
      %v311 = vshrl.u32 %v310, 7
      %v312 = vsub.s32 2, %v311
      %v313 = vrot.slane %v252, %v312
      %v314 = vlaneseq
      %v315 = vshrl.u32 %v314, 7
      %v316 = vsub.s32 3, %v315
      %v317 = vrot.slane %v252, %v316
      %v318 = vlaneseq
      %v319 = vshrl.u32 %v318, 7
      %v320 = vsub.s32 4, %v319
      %v321 = vrot.slane %v252, %v320
      %v322 = vlaneseq
      %v323 = vshrl.u32 %v322, 7
      %v324 = vsub.s32 5, %v323
      %v325 = vrot.slane %v252, %v324
      %v326 = vlaneseq
      %v327 = vshrl.u32 %v326, 7
      %v328 = vsub.s32 6, %v327
      %v329 = vrot.slane %v252, %v328
      %v330 = vlaneseq
      %v331 = vshrl.u32 %v330, 7
      %v332 = vsub.s32 7, %v331
      %v333 = vrot.slane %v252, %v332
      %v334 = vlaneseq
      %v335 = vshrl.u32 %v334, 7
      %v336 = vsub.s32 0, %v335
      %v337 = vrot.slane %v253, %v336
      %v338 = vlaneseq
      %v339 = vshrl.u32 %v338, 7
      %v340 = vsub.s32 1, %v339
      %v341 = vrot.slane %v253, %v340
      %v342 = vlaneseq
      %v343 = vshrl.u32 %v342, 7
      %v344 = vsub.s32 2, %v343
      %v345 = vrot.slane %v253, %v344
      %v346 = vlaneseq
      %v347 = vshrl.u32 %v346, 7
      %v348 = vsub.s32 3, %v347
      %v349 = vrot.slane %v253, %v348
      %v350 = vlaneseq
      %v351 = vshrl.u32 %v350, 7
      %v352 = vsub.s32 4, %v351
      %v353 = vrot.slane %v253, %v352
      %v354 = vlaneseq
      %v355 = vshrl.u32 %v354, 7
      %v356 = vsub.s32 5, %v355
      %v357 = vrot.slane %v253, %v356
      %v358 = vlaneseq
      %v359 = vshrl.u32 %v358, 7
      %v360 = vsub.s32 6, %v359
      %v361 = vrot.slane %v253, %v360
      %v362 = vlaneseq
      %v363 = vshrl.u32 %v362, 7
      %v364 = vsub.s32 7, %v363
      %v365 = vrot.slane %v253, %v364
      %v366 = vlaneseq
      %v367 = vshrl.u32 %v366, 7
      %v368 = vsub.s32 0, %v367
      %v369 = vrot.slane %v254, %v368
      %v370 = vlaneseq
      %v371 = vshrl.u32 %v370, 7
      %v372 = vsub.s32 1, %v371
      %v373 = vrot.slane %v254, %v372
      %v374 = vlaneseq
      %v375 = vshrl.u32 %v374, 7
      %v376 = vsub.s32 2, %v375
      %v377 = vrot.slane %v254, %v376
      %v378 = vlaneseq
      %v379 = vshrl.u32 %v378, 7
      %v380 = vsub.s32 3, %v379
      %v381 = vrot.slane %v254, %v380
      %v382 = vlaneseq
      %v383 = vshrl.u32 %v382, 7
      %v384 = vsub.s32 4, %v383
      %v385 = vrot.slane %v254, %v384
      %v386 = vlaneseq
      %v387 = vshrl.u32 %v386, 7
      %v388 = vsub.s32 5, %v387
      %v389 = vrot.slane %v254, %v388
      %v390 = vlaneseq
      %v391 = vshrl.u32 %v390, 7
      %v392 = vsub.s32 6, %v391
      %v393 = vrot.slane %v254, %v392
      %v394 = vlaneseq
      %v395 = vshrl.u32 %v394, 7
      %v396 = vsub.s32 7, %v395
      %v397 = vrot.slane %v254, %v396
      %v398 = vlaneseq
      %v399 = vshrl.u32 %v398, 7
      %v400 = vsub.s32 0, %v399
      %v401 = vrot.slane %v255, %v400
      %v402 = vlaneseq
      %v403 = vshrl.u32 %v402, 7
      %v404 = vsub.s32 1, %v403
      %v405 = vrot.slane %v255, %v404
      %v406 = vlaneseq
      %v407 = vshrl.u32 %v406, 7
      %v408 = vsub.s32 2, %v407
      %v409 = vrot.slane %v255, %v408
      %v410 = vlaneseq
      %v411 = vshrl.u32 %v410, 7
      %v412 = vsub.s32 3, %v411
      %v413 = vrot.slane %v255, %v412
      %v414 = vlaneseq
      %v415 = vshrl.u32 %v414, 7
      %v416 = vsub.s32 4, %v415
      %v417 = vrot.slane %v255, %v416
      %v418 = vlaneseq
      %v419 = vshrl.u32 %v418, 7
      %v420 = vsub.s32 5, %v419
      %v421 = vrot.slane %v255, %v420
      %v422 = vlaneseq
      %v423 = vshrl.u32 %v422, 7
      %v424 = vsub.s32 6, %v423
      %v425 = vrot.slane %v255, %v424
      %v426 = vlaneseq
      %v427 = vshrl.u32 %v426, 7
      %v428 = vsub.s32 7, %v427
      %v429 = vrot.slane %v255, %v428
      %v430 = vlaneseq
      %v431 = vshrl.u32 %v430, 7
      %v432 = vsub.s32 0, %v431
      %v433 = vrot.slane %v256, %v432
      %v434 = vlaneseq
      %v435 = vshrl.u32 %v434, 7
      %v436 = vsub.s32 1, %v435
      %v437 = vrot.slane %v256, %v436
      %v438 = vlaneseq
      %v439 = vshrl.u32 %v438, 7
      %v440 = vsub.s32 2, %v439
      %v441 = vrot.slane %v256, %v440
      %v442 = vlaneseq
      %v443 = vshrl.u32 %v442, 7
      %v444 = vsub.s32 3, %v443
      %v445 = vrot.slane %v256, %v444
      %v446 = vlaneseq
      %v447 = vshrl.u32 %v446, 7
      %v448 = vsub.s32 4, %v447
      %v449 = vrot.slane %v256, %v448
      %v450 = vlaneseq
      %v451 = vshrl.u32 %v450, 7
      %v452 = vsub.s32 5, %v451
      %v453 = vrot.slane %v256, %v452
      %v454 = vlaneseq
      %v455 = vshrl.u32 %v454, 7
      %v456 = vsub.s32 6, %v455
      %v457 = vrot.slane %v256, %v456
      %v458 = vlaneseq
      %v459 = vshrl.u32 %v458, 7
      %v460 = vsub.s32 7, %v459
      %v461 = vrot.slane %v256, %v460
      %v462 = vlaneseq
      %v463 = vshrl.u32 %v462, 7
      %v464 = vsub.s32 0, %v463
      %v465 = vrot.slane %v257, %v464
      %v466 = vlaneseq
      %v467 = vshrl.u32 %v466, 7
      %v468 = vsub.s32 1, %v467
      %v469 = vrot.slane %v257, %v468
      %v470 = vlaneseq
      %v471 = vshrl.u32 %v470, 7
      %v472 = vsub.s32 2, %v471
      %v473 = vrot.slane %v257, %v472
      %v474 = vlaneseq
      %v475 = vshrl.u32 %v474, 7
      %v476 = vsub.s32 3, %v475
      %v477 = vrot.slane %v257, %v476
      %v478 = vlaneseq
      %v479 = vshrl.u32 %v478, 7
      %v480 = vsub.s32 4, %v479
      %v481 = vrot.slane %v257, %v480
      %v482 = vlaneseq
      %v483 = vshrl.u32 %v482, 7
      %v484 = vsub.s32 5, %v483
      %v485 = vrot.slane %v257, %v484
      %v486 = vlaneseq
      %v487 = vshrl.u32 %v486, 7
      %v488 = vsub.s32 6, %v487
      %v489 = vrot.slane %v257, %v488
      %v490 = vlaneseq
      %v491 = vshrl.u32 %v490, 7
      %v492 = vsub.s32 7, %v491
      %v493 = vrot.slane %v257, %v492
      %v494 = vlaneseq
      %v495 = vshrl.u32 %v494, 7
      %v496 = vsub.s32 0, %v495
      %v497 = vrot.slane %v258, %v496
      %v498 = vlaneseq
      %v499 = vshrl.u32 %v498, 7
      %v500 = vsub.s32 1, %v499
      %v501 = vrot.slane %v258, %v500
      %v502 = vlaneseq
      %v503 = vshrl.u32 %v502, 7
      %v504 = vsub.s32 2, %v503
      %v505 = vrot.slane %v258, %v504
      %v506 = vlaneseq
      %v507 = vshrl.u32 %v506, 7
      %v508 = vsub.s32 3, %v507
      %v509 = vrot.slane %v258, %v508
      %v510 = vlaneseq
      %v511 = vshrl.u32 %v510, 7
      %v512 = vsub.s32 4, %v511
      %v513 = vrot.slane %v258, %v512
      %v514 = vlaneseq
      %v515 = vshrl.u32 %v514, 7
      %v516 = vsub.s32 5, %v515
      %v517 = vrot.slane %v258, %v516
      %v518 = vlaneseq
      %v519 = vshrl.u32 %v518, 7
      %v520 = vsub.s32 6, %v519
      %v521 = vrot.slane %v258, %v520
      %v522 = vlaneseq
      %v523 = vshrl.u32 %v522, 7
      %v524 = vsub.s32 7, %v523
      %v525 = vrot.slane %v258, %v524
      %v526 = vlaneseq
      %v527 = vshrl.u32 %v526, 7
      %v528 = vsub.s32 0, %v527
      %v529 = vrot.slane %v259, %v528
      %v530 = vlaneseq
      %v531 = vshrl.u32 %v530, 7
      %v532 = vsub.s32 1, %v531
      %v533 = vrot.slane %v259, %v532
      %v534 = vlaneseq
      %v535 = vshrl.u32 %v534, 7
      %v536 = vsub.s32 2, %v535
      %v537 = vrot.slane %v259, %v536
      %v538 = vlaneseq
      %v539 = vshrl.u32 %v538, 7
      %v540 = vsub.s32 3, %v539
      %v541 = vrot.slane %v259, %v540
      %v542 = vlaneseq
      %v543 = vshrl.u32 %v542, 7
      %v544 = vsub.s32 4, %v543
      %v545 = vrot.slane %v259, %v544
      %v546 = vlaneseq
      %v547 = vshrl.u32 %v546, 7
      %v548 = vsub.s32 5, %v547
      %v549 = vrot.slane %v259, %v548
      %v550 = vlaneseq
      %v551 = vshrl.u32 %v550, 7
      %v552 = vsub.s32 6, %v551
      %v553 = vrot.slane %v259, %v552
      %v554 = vlaneseq
      %v555 = vshrl.u32 %v554, 7
      %v556 = vsub.s32 7, %v555
      %v557 = vrot.slane %v259, %v556
      %v558 = vlaneseq
      %v559 = vshrl.u32 %v558, 7
      %v560 = vsub.s32 0, %v559
      %v561 = vrot.slane %v260, %v560
      %v562 = vlaneseq
      %v563 = vshrl.u32 %v562, 7
      %v564 = vsub.s32 1, %v563
      %v565 = vrot.slane %v260, %v564
      %v566 = vlaneseq
      %v567 = vshrl.u32 %v566, 7
      %v568 = vsub.s32 2, %v567
      %v569 = vrot.slane %v260, %v568
      %v570 = vlaneseq
      %v571 = vshrl.u32 %v570, 7
      %v572 = vsub.s32 3, %v571
      %v573 = vrot.slane %v260, %v572
      %v574 = vlaneseq
      %v575 = vshrl.u32 %v574, 7
      %v576 = vsub.s32 4, %v575
      %v577 = vrot.slane %v260, %v576
      %v578 = vlaneseq
      %v579 = vshrl.u32 %v578, 7
      %v580 = vsub.s32 5, %v579
      %v581 = vrot.slane %v260, %v580
      %v582 = vlaneseq
      %v583 = vshrl.u32 %v582, 7
      %v584 = vsub.s32 6, %v583
      %v585 = vrot.slane %v260, %v584
      %v586 = vlaneseq
      %v587 = vshrl.u32 %v586, 7
      %v588 = vsub.s32 7, %v587
      %v589 = vrot.slane %v260, %v588
      %v590 = vlaneseq
      %v591 = vshrl.u32 %v590, 7
      %v592 = vsub.s32 0, %v591
      %v593 = vrot.slane %v261, %v592
      %v594 = vlaneseq
      %v595 = vshrl.u32 %v594, 7
      %v596 = vsub.s32 1, %v595
      %v597 = vrot.slane %v261, %v596
      %v598 = vlaneseq
      %v599 = vshrl.u32 %v598, 7
      %v600 = vsub.s32 2, %v599
      %v601 = vrot.slane %v261, %v600
      %v602 = vlaneseq
      %v603 = vshrl.u32 %v602, 7
      %v604 = vsub.s32 3, %v603
      %v605 = vrot.slane %v261, %v604
      %v606 = vlaneseq
      %v607 = vshrl.u32 %v606, 7
      %v608 = vsub.s32 4, %v607
      %v609 = vrot.slane %v261, %v608
      %v610 = vlaneseq
      %v611 = vshrl.u32 %v610, 7
      %v612 = vsub.s32 5, %v611
      %v613 = vrot.slane %v261, %v612
      %v614 = vlaneseq
      %v615 = vshrl.u32 %v614, 7
      %v616 = vsub.s32 6, %v615
      %v617 = vrot.slane %v261, %v616
      %v618 = vlaneseq
      %v619 = vshrl.u32 %v618, 7
      %v620 = vsub.s32 7, %v619
      %v621 = vrot.slane %v261, %v620
      %v622 = vlaneseq
      %v623 = vshrl.u32 %v622, 7
      %v624 = vsub.s32 0, %v623
      %v625 = vrot.slane %v262, %v624
      %v626 = vlaneseq
      %v627 = vshrl.u32 %v626, 7
      %v628 = vsub.s32 1, %v627
      %v629 = vrot.slane %v262, %v628
      %v630 = vlaneseq
      %v631 = vshrl.u32 %v630, 7
      %v632 = vsub.s32 2, %v631
      %v633 = vrot.slane %v262, %v632
      %v634 = vlaneseq
      %v635 = vshrl.u32 %v634, 7
      %v636 = vsub.s32 3, %v635
      %v637 = vrot.slane %v262, %v636
      %v638 = vlaneseq
      %v639 = vshrl.u32 %v638, 7
      %v640 = vsub.s32 4, %v639
      %v641 = vrot.slane %v262, %v640
      %v642 = vlaneseq
      %v643 = vshrl.u32 %v642, 7
      %v644 = vsub.s32 5, %v643
      %v645 = vrot.slane %v262, %v644
      %v646 = vlaneseq
      %v647 = vshrl.u32 %v646, 7
      %v648 = vsub.s32 6, %v647
      %v649 = vrot.slane %v262, %v648
      %v650 = vlaneseq
      %v651 = vshrl.u32 %v650, 7
      %v652 = vsub.s32 7, %v651
      %v653 = vrot.slane %v262, %v652
      %v654 = vlaneseq
      %v655 = vshrl.u32 %v654, 7
      %v656 = vsub.s32 0, %v655
      %v657 = vrot.slane %v263, %v656
      %v658 = vlaneseq
      %v659 = vshrl.u32 %v658, 7
      %v660 = vsub.s32 1, %v659
      %v661 = vrot.slane %v263, %v660
      %v662 = vlaneseq
      %v663 = vshrl.u32 %v662, 7
      %v664 = vsub.s32 2, %v663
      %v665 = vrot.slane %v263, %v664
      %v666 = vlaneseq
      %v667 = vshrl.u32 %v666, 7
      %v668 = vsub.s32 3, %v667
      %v669 = vrot.slane %v263, %v668
      %v670 = vlaneseq
      %v671 = vshrl.u32 %v670, 7
      %v672 = vsub.s32 4, %v671
      %v673 = vrot.slane %v263, %v672
      %v674 = vlaneseq
      %v675 = vshrl.u32 %v674, 7
      %v676 = vsub.s32 5, %v675
      %v677 = vrot.slane %v263, %v676
      %v678 = vlaneseq
      %v679 = vshrl.u32 %v678, 7
      %v680 = vsub.s32 6, %v679
      %v681 = vrot.slane %v263, %v680
      %v682 = vlaneseq
      %v683 = vshrl.u32 %v682, 7
      %v684 = vsub.s32 7, %v683
      %v685 = vrot.slane %v263, %v684
      %v686 = vlaneseq
      %v687 = vshrl.u32 %v686, 7
      %v688 = vsub.s32 0, %v687
      %v689 = vrot.slane %v264, %v688
      %v690 = vlaneseq
      %v691 = vshrl.u32 %v690, 7
      %v692 = vsub.s32 1, %v691
      %v693 = vrot.slane %v264, %v692
      %v694 = vlaneseq
      %v695 = vshrl.u32 %v694, 7
      %v696 = vsub.s32 2, %v695
      %v697 = vrot.slane %v264, %v696
      %v698 = vlaneseq
      %v699 = vshrl.u32 %v698, 7
      %v700 = vsub.s32 3, %v699
      %v701 = vrot.slane %v264, %v700
      %v702 = vlaneseq
      %v703 = vshrl.u32 %v702, 7
      %v704 = vsub.s32 4, %v703
      %v705 = vrot.slane %v264, %v704
      %v706 = vlaneseq
      %v707 = vshrl.u32 %v706, 7
      %v708 = vsub.s32 5, %v707
      %v709 = vrot.slane %v264, %v708
      %v710 = vlaneseq
      %v711 = vshrl.u32 %v710, 7
      %v712 = vsub.s32 6, %v711
      %v713 = vrot.slane %v264, %v712
      %v714 = vlaneseq
      %v715 = vshrl.u32 %v714, 7
      %v716 = vsub.s32 7, %v715
      %v717 = vrot.slane %v264, %v716
      %v718 = vlaneseq
      %v719 = vshrl.u32 %v718, 7
      %v720 = vsub.s32 0, %v719
      %v721 = vrot.slane %v265, %v720
      %v722 = vlaneseq
      %v723 = vshrl.u32 %v722, 7
      %v724 = vsub.s32 1, %v723
      %v725 = vrot.slane %v265, %v724
      %v726 = vlaneseq
      %v727 = vshrl.u32 %v726, 7
      %v728 = vsub.s32 2, %v727
      %v729 = vrot.slane %v265, %v728
      %v730 = vlaneseq
      %v731 = vshrl.u32 %v730, 7
      %v732 = vsub.s32 3, %v731
      %v733 = vrot.slane %v265, %v732
      %v734 = vlaneseq
      %v735 = vshrl.u32 %v734, 7
      %v736 = vsub.s32 4, %v735
      %v737 = vrot.slane %v265, %v736
      %v738 = vlaneseq
      %v739 = vshrl.u32 %v738, 7
      %v740 = vsub.s32 5, %v739
      %v741 = vrot.slane %v265, %v740
      %v742 = vlaneseq
      %v743 = vshrl.u32 %v742, 7
      %v744 = vsub.s32 6, %v743
      %v745 = vrot.slane %v265, %v744
      %v746 = vlaneseq
      %v747 = vshrl.u32 %v746, 7
      %v748 = vsub.s32 7, %v747
      %v749 = vrot.slane %v265, %v748
      %v750 = vlaneseq
      %v751 = vshrl.u32 %v750, 7
      %v752 = vsub.s32 0, %v751
      %v753 = vrot.slane %v266, %v752
      %v754 = vlaneseq
      %v755 = vshrl.u32 %v754, 7
      %v756 = vsub.s32 1, %v755
      %v757 = vrot.slane %v266, %v756
      %v758 = vlaneseq
      %v759 = vshrl.u32 %v758, 7
      %v760 = vsub.s32 2, %v759
      %v761 = vrot.slane %v266, %v760
      %v762 = vlaneseq
      %v763 = vshrl.u32 %v762, 7
      %v764 = vsub.s32 3, %v763
      %v765 = vrot.slane %v266, %v764
      %v766 = vlaneseq
      %v767 = vshrl.u32 %v766, 7
      %v768 = vsub.s32 4, %v767
      %v769 = vrot.slane %v266, %v768
      %v770 = vlaneseq
      %v771 = vshrl.u32 %v770, 7
      %v772 = vsub.s32 5, %v771
      %v773 = vrot.slane %v266, %v772
      %v774 = vlaneseq
      %v775 = vshrl.u32 %v774, 7
      %v776 = vsub.s32 6, %v775
      %v777 = vrot.slane %v266, %v776
      %v778 = vlaneseq
      %v779 = vshrl.u32 %v778, 7
      %v780 = vsub.s32 7, %v779
      %v781 = vrot.slane %v266, %v780
      %v782 = vlaneseq
      %v783 = vshrl.u32 %v782, 7
      %v784 = vsub.s32 0, %v783
      %v785 = vrot.slane %v267, %v784
      %v786 = vlaneseq
      %v787 = vshrl.u32 %v786, 7
      %v788 = vsub.s32 1, %v787
      %v789 = vrot.slane %v267, %v788
      %v790 = vlaneseq
      %v791 = vshrl.u32 %v790, 7
      %v792 = vsub.s32 2, %v791
      %v793 = vrot.slane %v267, %v792
      %v794 = vlaneseq
      %v795 = vshrl.u32 %v794, 7
      %v796 = vsub.s32 3, %v795
      %v797 = vrot.slane %v267, %v796
      %v798 = vlaneseq
      %v799 = vshrl.u32 %v798, 7
      %v800 = vsub.s32 4, %v799
      %v801 = vrot.slane %v267, %v800
      %v802 = vlaneseq
      %v803 = vshrl.u32 %v802, 7
      %v804 = vsub.s32 5, %v803
      %v805 = vrot.slane %v267, %v804
      %v806 = vlaneseq
      %v807 = vshrl.u32 %v806, 7
      %v808 = vsub.s32 6, %v807
      %v809 = vrot.slane %v267, %v808
      %v810 = vlaneseq
      %v811 = vshrl.u32 %v810, 7
      %v812 = vsub.s32 7, %v811
      %v813 = vrot.slane %v267, %v812
      %v814 = vlaneseq
      %v815 = vshrl.u32 %v814, 7
      %v816 = vsub.s32 0, %v815
      %v817 = vrot.slane %v268, %v816
      %v818 = vlaneseq
      %v819 = vshrl.u32 %v818, 7
      %v820 = vsub.s32 1, %v819
      %v821 = vrot.slane %v268, %v820
      %v822 = vlaneseq
      %v823 = vshrl.u32 %v822, 7
      %v824 = vsub.s32 2, %v823
      %v825 = vrot.slane %v268, %v824
      %v826 = vlaneseq
      %v827 = vshrl.u32 %v826, 7
      %v828 = vsub.s32 3, %v827
      %v829 = vrot.slane %v268, %v828
      %v830 = vlaneseq
      %v831 = vshrl.u32 %v830, 7
      %v832 = vsub.s32 4, %v831
      %v833 = vrot.slane %v268, %v832
      %v834 = vlaneseq
      %v835 = vshrl.u32 %v834, 7
      %v836 = vsub.s32 5, %v835
      %v837 = vrot.slane %v268, %v836
      %v838 = vlaneseq
      %v839 = vshrl.u32 %v838, 7
      %v840 = vsub.s32 6, %v839
      %v841 = vrot.slane %v268, %v840
      %v842 = vlaneseq
      %v843 = vshrl.u32 %v842, 7
      %v844 = vsub.s32 7, %v843
      %v845 = vrot.slane %v268, %v844
      %v846 = vlaneseq
      %v847 = vshrl.u32 %v846, 7
      %v848 = vsub.s32 0, %v847
      %v849 = vrot.slane %v269, %v848
      %v850 = vlaneseq
      %v851 = vshrl.u32 %v850, 7
      %v852 = vsub.s32 1, %v851
      %v853 = vrot.slane %v269, %v852
      %v854 = vlaneseq
      %v855 = vshrl.u32 %v854, 7
      %v856 = vsub.s32 2, %v855
      %v857 = vrot.slane %v269, %v856
      %v858 = vlaneseq
      %v859 = vshrl.u32 %v858, 7
      %v860 = vsub.s32 3, %v859
      %v861 = vrot.slane %v269, %v860
      %v862 = vlaneseq
      %v863 = vshrl.u32 %v862, 7
      %v864 = vsub.s32 4, %v863
      %v865 = vrot.slane %v269, %v864
      %v866 = vlaneseq
      %v867 = vshrl.u32 %v866, 7
      %v868 = vsub.s32 5, %v867
      %v869 = vrot.slane %v269, %v868
      %v870 = vlaneseq
      %v871 = vshrl.u32 %v870, 7
      %v872 = vsub.s32 6, %v871
      %v873 = vrot.slane %v269, %v872
      %v874 = vlaneseq
      %v875 = vshrl.u32 %v874, 7
      %v876 = vsub.s32 7, %v875
      %v877 = vrot.slane %v269, %v876
      %v878 = vlaneseq
      %v879 = vshrl.u32 %v878, 7
      %v880 = vsub.s32 0, %v879
      %v881 = vrot.slane %v270, %v880
      %v882 = vlaneseq
      %v883 = vshrl.u32 %v882, 7
      %v884 = vsub.s32 1, %v883
      %v885 = vrot.slane %v270, %v884
      %v886 = vlaneseq
      %v887 = vshrl.u32 %v886, 7
      %v888 = vsub.s32 2, %v887
      %v889 = vrot.slane %v270, %v888
      %v890 = vlaneseq
      %v891 = vshrl.u32 %v890, 7
      %v892 = vsub.s32 3, %v891
      %v893 = vrot.slane %v270, %v892
      %v894 = vlaneseq
      %v895 = vshrl.u32 %v894, 7
      %v896 = vsub.s32 4, %v895
      %v897 = vrot.slane %v270, %v896
      %v898 = vlaneseq
      %v899 = vshrl.u32 %v898, 7
      %v900 = vsub.s32 5, %v899
      %v901 = vrot.slane %v270, %v900
      %v902 = vlaneseq
      %v903 = vshrl.u32 %v902, 7
      %v904 = vsub.s32 6, %v903
      %v905 = vrot.slane %v270, %v904
      %v906 = vlaneseq
      %v907 = vshrl.u32 %v906, 7
      %v908 = vsub.s32 7, %v907
      %v909 = vrot.slane %v270, %v908
      %v910 = vlaneseq
      %v911 = vshrl.u32 %v910, 7
      %v912 = vsub.s32 0, %v911
      %v913 = vrot.slane %v271, %v912
      %v914 = vlaneseq
      %v915 = vshrl.u32 %v914, 7
      %v916 = vsub.s32 1, %v915
      %v917 = vrot.slane %v271, %v916
      %v918 = vlaneseq
      %v919 = vshrl.u32 %v918, 7
      %v920 = vsub.s32 2, %v919
      %v921 = vrot.slane %v271, %v920
      %v922 = vlaneseq
      %v923 = vshrl.u32 %v922, 7
      %v924 = vsub.s32 3, %v923
      %v925 = vrot.slane %v271, %v924
      %v926 = vlaneseq
      %v927 = vshrl.u32 %v926, 7
      %v928 = vsub.s32 4, %v927
      %v929 = vrot.slane %v271, %v928
      %v930 = vlaneseq
      %v931 = vshrl.u32 %v930, 7
      %v932 = vsub.s32 5, %v931
      %v933 = vrot.slane %v271, %v932
      %v934 = vlaneseq
      %v935 = vshrl.u32 %v934, 7
      %v936 = vsub.s32 6, %v935
      %v937 = vrot.slane %v271, %v936
      %v938 = vlaneseq
      %v939 = vshrl.u32 %v938, 7
      %v940 = vsub.s32 7, %v939
      %v941 = vrot.slane %v271, %v940
      %v942 = vlaneseq
      %v943 = vshrl.u32 %v942, 7
      %v944 = vsub.s32 0, %v943
      %v945 = vrot.slane %v272, %v944
      %v946 = vlaneseq
      %v947 = vshrl.u32 %v946, 7
      %v948 = vsub.s32 1, %v947
      %v949 = vrot.slane %v272, %v948
      %v950 = vlaneseq
      %v951 = vshrl.u32 %v950, 7
      %v952 = vsub.s32 2, %v951
      %v953 = vrot.slane %v272, %v952
      %v954 = vlaneseq
      %v955 = vshrl.u32 %v954, 7
      %v956 = vsub.s32 3, %v955
      %v957 = vrot.slane %v272, %v956
      %v958 = vlaneseq
      %v959 = vshrl.u32 %v958, 7
      %v960 = vsub.s32 4, %v959
      %v961 = vrot.slane %v272, %v960
      %v962 = vlaneseq
      %v963 = vshrl.u32 %v962, 7
      %v964 = vsub.s32 5, %v963
      %v965 = vrot.slane %v272, %v964
      %v966 = vlaneseq
      %v967 = vshrl.u32 %v966, 7
      %v968 = vsub.s32 6, %v967
      %v969 = vrot.slane %v272, %v968
      %v970 = vlaneseq
      %v971 = vshrl.u32 %v970, 7
      %v972 = vsub.s32 7, %v971
      %v973 = vrot.slane %v272, %v972
      %v974 = vlaneseq
      %v975 = vshrl.u32 %v974, 7
      %v976 = vsub.s32 0, %v975
      %v977 = vrot.slane %v273, %v976
      %v978 = vlaneseq
      %v979 = vshrl.u32 %v978, 7
      %v980 = vsub.s32 1, %v979
      %v981 = vrot.slane %v273, %v980
      %v982 = vlaneseq
      %v983 = vshrl.u32 %v982, 7
      %v984 = vsub.s32 2, %v983
      %v985 = vrot.slane %v273, %v984
      %v986 = vlaneseq
      %v987 = vshrl.u32 %v986, 7
      %v988 = vsub.s32 3, %v987
      %v989 = vrot.slane %v273, %v988
      %v990 = vlaneseq
      %v991 = vshrl.u32 %v990, 7
      %v992 = vsub.s32 4, %v991
      %v993 = vrot.slane %v273, %v992
      %v994 = vlaneseq
      %v995 = vshrl.u32 %v994, 7
      %v996 = vsub.s32 5, %v995
      %v997 = vrot.slane %v273, %v996
      %v998 = vlaneseq
      %v999 = vshrl.u32 %v998, 7
      %v1000 = vsub.s32 6, %v999
      %v1001 = vrot.slane %v273, %v1000
      %v1002 = vlaneseq
      %v1003 = vshrl.u32 %v1002, 7
      %v1004 = vsub.s32 7, %v1003
      %v1005 = vrot.slane %v273, %v1004
      %v1006 = vlaneseq
      %v1007 = vshrl.u32 %v1006, 7
      %v1008 = vsub.s32 0, %v1007
      %v1009 = vrot.slane %v274, %v1008
      %v1010 = vlaneseq
      %v1011 = vshrl.u32 %v1010, 7
      %v1012 = vsub.s32 1, %v1011
      %v1013 = vrot.slane %v274, %v1012
      %v1014 = vlaneseq
      %v1015 = vshrl.u32 %v1014, 7
      %v1016 = vsub.s32 2, %v1015
      %v1017 = vrot.slane %v274, %v1016
      %v1018 = vlaneseq
      %v1019 = vshrl.u32 %v1018, 7
      %v1020 = vsub.s32 3, %v1019
      %v1021 = vrot.slane %v274, %v1020
      %v1022 = vlaneseq
      %v1023 = vshrl.u32 %v1022, 7
      %v1024 = vsub.s32 4, %v1023
      %v1025 = vrot.slane %v274, %v1024
      %v1026 = vlaneseq
      %v1027 = vshrl.u32 %v1026, 7
      %v1028 = vsub.s32 5, %v1027
      %v1029 = vrot.slane %v274, %v1028
      %v1030 = vlaneseq
      %v1031 = vshrl.u32 %v1030, 7
      %v1032 = vsub.s32 6, %v1031
      %v1033 = vrot.slane %v274, %v1032
      %v1034 = vlaneseq
      %v1035 = vshrl.u32 %v1034, 7
      %v1036 = vsub.s32 7, %v1035
      %v1037 = vrot.slane %v274, %v1036
      %v1038 = vlaneseq
      %v1039 = vshrl.u32 %v1038, 7
      %v1040 = vsub.s32 0, %v1039
      %v1041 = vrot.slane %v275, %v1040
      %v1042 = vlaneseq
      %v1043 = vshrl.u32 %v1042, 7
      %v1044 = vsub.s32 1, %v1043
      %v1045 = vrot.slane %v275, %v1044
      %v1046 = vlaneseq
      %v1047 = vshrl.u32 %v1046, 7
      %v1048 = vsub.s32 2, %v1047
      %v1049 = vrot.slane %v275, %v1048
      %v1050 = vlaneseq
      %v1051 = vshrl.u32 %v1050, 7
      %v1052 = vsub.s32 3, %v1051
      %v1053 = vrot.slane %v275, %v1052
      %v1054 = vlaneseq
      %v1055 = vshrl.u32 %v1054, 7
      %v1056 = vsub.s32 4, %v1055
      %v1057 = vrot.slane %v275, %v1056
      %v1058 = vlaneseq
      %v1059 = vshrl.u32 %v1058, 7
      %v1060 = vsub.s32 5, %v1059
      %v1061 = vrot.slane %v275, %v1060
      %v1062 = vlaneseq
      %v1063 = vshrl.u32 %v1062, 7
      %v1064 = vsub.s32 6, %v1063
      %v1065 = vrot.slane %v275, %v1064
      %v1066 = vlaneseq
      %v1067 = vshrl.u32 %v1066, 7
      %v1068 = vsub.s32 7, %v1067
      %v1069 = vrot.slane %v275, %v1068
      %v1070 = vlaneseq
      %v1071 = vshrl.u32 %v1070, 7
      %v1072 = vsub.s32 0, %v1071
      %v1073 = vrot.slane %v276, %v1072
      %v1074 = vlaneseq
      %v1075 = vshrl.u32 %v1074, 7
      %v1076 = vsub.s32 1, %v1075
      %v1077 = vrot.slane %v276, %v1076
      %v1078 = vlaneseq
      %v1079 = vshrl.u32 %v1078, 7
      %v1080 = vsub.s32 2, %v1079
      %v1081 = vrot.slane %v276, %v1080
      %v1082 = vlaneseq
      %v1083 = vshrl.u32 %v1082, 7
      %v1084 = vsub.s32 3, %v1083
      %v1085 = vrot.slane %v276, %v1084
      %v1086 = vlaneseq
      %v1087 = vshrl.u32 %v1086, 7
      %v1088 = vsub.s32 4, %v1087
      %v1089 = vrot.slane %v276, %v1088
      %v1090 = vlaneseq
      %v1091 = vshrl.u32 %v1090, 7
      %v1092 = vsub.s32 5, %v1091
      %v1093 = vrot.slane %v276, %v1092
      %v1094 = vcombine.low %v305, %v309
      %v1095 = vcombine.low %v313, %v317
      %v1097 = vunpack.c.l.s4 1983009808
      %v1098 = vunpack.c.0.s8 %v1097
      %v1099 = vlaneseq
      %v1100 = vshrl.u32 %v1099, 7
      %v1101 = vsub.s32 %v1098, %v1100
      %v1102 = vrot.slane %v1094, %v1101
      %v1104 = vunpack.c.l.s4 1983009808
      %v1105 = vunpack.c.0.s8 %v1104
      %v1106 = vlaneseq
      %v1107 = vshrl.u32 %v1106, 7
      %v1108 = vsub.s32 %v1105, %v1107
      %v1109 = vrot.slane %v1095, %v1108
      %v1110 = vcombine.low %v1102, %v1109
      %v1111 = vcombine.low %v321, %v325
      %v1112 = vcombine.low %v329, %v333
      %v1114 = vunpack.c.l.s4 1983009808
      %v1115 = vunpack.c.0.s8 %v1114
      %v1116 = vlaneseq
      %v1117 = vshrl.u32 %v1116, 7
      %v1118 = vsub.s32 %v1115, %v1117
      %v1119 = vrot.slane %v1111, %v1118
      %v1121 = vunpack.c.l.s4 1983009808
      %v1122 = vunpack.c.0.s8 %v1121
      %v1123 = vlaneseq
      %v1124 = vshrl.u32 %v1123, 7
      %v1125 = vsub.s32 %v1122, %v1124
      %v1126 = vrot.slane %v1112, %v1125
      %v1127 = vcombine.low %v1119, %v1126
      %v1128 = vcombine.low %v337, %v341
      %v1129 = vcombine.low %v345, %v349
      %v1131 = vunpack.c.l.s4 1983009808
      %v1132 = vunpack.c.0.s8 %v1131
      %v1133 = vlaneseq
      %v1134 = vshrl.u32 %v1133, 7
      %v1135 = vsub.s32 %v1132, %v1134
      %v1136 = vrot.slane %v1128, %v1135
      %v1138 = vunpack.c.l.s4 1983009808
      %v1139 = vunpack.c.0.s8 %v1138
      %v1140 = vlaneseq
      %v1141 = vshrl.u32 %v1140, 7
      %v1142 = vsub.s32 %v1139, %v1141
      %v1143 = vrot.slane %v1129, %v1142
      %v1144 = vcombine.low %v1136, %v1143
      %v1145 = vcombine.low %v353, %v357
      %v1146 = vcombine.low %v361, %v365
      %v1148 = vunpack.c.l.s4 1983009808
      %v1149 = vunpack.c.0.s8 %v1148
      %v1150 = vlaneseq
      %v1151 = vshrl.u32 %v1150, 7
      %v1152 = vsub.s32 %v1149, %v1151
      %v1153 = vrot.slane %v1145, %v1152
      %v1155 = vunpack.c.l.s4 1983009808
      %v1156 = vunpack.c.0.s8 %v1155
      %v1157 = vlaneseq
      %v1158 = vshrl.u32 %v1157, 7
      %v1159 = vsub.s32 %v1156, %v1158
      %v1160 = vrot.slane %v1146, %v1159
      %v1161 = vcombine.low %v1153, %v1160
      %v1162 = vcombine.low %v369, %v373
      %v1163 = vcombine.low %v377, %v381
      %v1165 = vunpack.c.l.s4 1983009808
      %v1166 = vunpack.c.0.s8 %v1165
      %v1167 = vlaneseq
      %v1168 = vshrl.u32 %v1167, 7
      %v1169 = vsub.s32 %v1166, %v1168
      %v1170 = vrot.slane %v1162, %v1169
      %v1172 = vunpack.c.l.s4 1983009808
      %v1173 = vunpack.c.0.s8 %v1172
      %v1174 = vlaneseq
      %v1175 = vshrl.u32 %v1174, 7
      %v1176 = vsub.s32 %v1173, %v1175
      %v1177 = vrot.slane %v1163, %v1176
      %v1178 = vcombine.low %v1170, %v1177
      %v1179 = vcombine.low %v385, %v389
      %v1180 = vcombine.low %v393, %v397
      %v1182 = vunpack.c.l.s4 1983009808
      %v1183 = vunpack.c.0.s8 %v1182
      %v1184 = vlaneseq
      %v1185 = vshrl.u32 %v1184, 7
      %v1186 = vsub.s32 %v1183, %v1185
      %v1187 = vrot.slane %v1179, %v1186
      %v1189 = vunpack.c.l.s4 1983009808
      %v1190 = vunpack.c.0.s8 %v1189
      %v1191 = vlaneseq
      %v1192 = vshrl.u32 %v1191, 7
      %v1193 = vsub.s32 %v1190, %v1192
      %v1194 = vrot.slane %v1180, %v1193
      %v1195 = vcombine.low %v1187, %v1194
      %v1196 = vcombine.low %v401, %v405
      %v1197 = vcombine.low %v409, %v413
      %v1199 = vunpack.c.l.s4 1983009808
      %v1200 = vunpack.c.0.s8 %v1199
      %v1201 = vlaneseq
      %v1202 = vshrl.u32 %v1201, 7
      %v1203 = vsub.s32 %v1200, %v1202
      %v1204 = vrot.slane %v1196, %v1203
      %v1206 = vunpack.c.l.s4 1983009808
      %v1207 = vunpack.c.0.s8 %v1206
      %v1208 = vlaneseq
      %v1209 = vshrl.u32 %v1208, 7
      %v1210 = vsub.s32 %v1207, %v1209
      %v1211 = vrot.slane %v1197, %v1210
      %v1212 = vcombine.low %v1204, %v1211
      %v1213 = vcombine.low %v417, %v421
      %v1214 = vcombine.low %v425, %v429
      %v1216 = vunpack.c.l.s4 1983009808
      %v1217 = vunpack.c.0.s8 %v1216
      %v1218 = vlaneseq
      %v1219 = vshrl.u32 %v1218, 7
      %v1220 = vsub.s32 %v1217, %v1219
      %v1221 = vrot.slane %v1213, %v1220
      %v1223 = vunpack.c.l.s4 1983009808
      %v1224 = vunpack.c.0.s8 %v1223
      %v1225 = vlaneseq
      %v1226 = vshrl.u32 %v1225, 7
      %v1227 = vsub.s32 %v1224, %v1226
      %v1228 = vrot.slane %v1214, %v1227
      %v1229 = vcombine.low %v1221, %v1228
      %v1230 = vcombine.low %v433, %v437
      %v1231 = vcombine.low %v441, %v445
      %v1233 = vunpack.c.l.s4 1983009808
      %v1234 = vunpack.c.0.s8 %v1233
      %v1235 = vlaneseq
      %v1236 = vshrl.u32 %v1235, 7
      %v1237 = vsub.s32 %v1234, %v1236
      %v1238 = vrot.slane %v1230, %v1237
      %v1240 = vunpack.c.l.s4 1983009808
      %v1241 = vunpack.c.0.s8 %v1240
      %v1242 = vlaneseq
      %v1243 = vshrl.u32 %v1242, 7
      %v1244 = vsub.s32 %v1241, %v1243
      %v1245 = vrot.slane %v1231, %v1244
      %v1246 = vcombine.low %v1238, %v1245
      %v1247 = vcombine.low %v449, %v453
      %v1248 = vcombine.low %v457, %v461
      %v1250 = vunpack.c.l.s4 1983009808
      %v1251 = vunpack.c.0.s8 %v1250
      %v1252 = vlaneseq
      %v1253 = vshrl.u32 %v1252, 7
      %v1254 = vsub.s32 %v1251, %v1253
      %v1255 = vrot.slane %v1247, %v1254
      %v1257 = vunpack.c.l.s4 1983009808
      %v1258 = vunpack.c.0.s8 %v1257
      %v1259 = vlaneseq
      %v1260 = vshrl.u32 %v1259, 7
      %v1261 = vsub.s32 %v1258, %v1260
      %v1262 = vrot.slane %v1248, %v1261
      %v1263 = vcombine.low %v1255, %v1262
      %v1264 = vcombine.low %v465, %v469
      %v1265 = vcombine.low %v473, %v477
      %v1267 = vunpack.c.l.s4 1983009808
      %v1268 = vunpack.c.0.s8 %v1267
      %v1269 = vlaneseq
      %v1270 = vshrl.u32 %v1269, 7
      %v1271 = vsub.s32 %v1268, %v1270
      %v1272 = vrot.slane %v1264, %v1271
      %v1274 = vunpack.c.l.s4 1983009808
      %v1275 = vunpack.c.0.s8 %v1274
      %v1276 = vlaneseq
      %v1277 = vshrl.u32 %v1276, 7
      %v1278 = vsub.s32 %v1275, %v1277
      %v1279 = vrot.slane %v1265, %v1278
      %v1280 = vcombine.low %v1272, %v1279
      %v1281 = vcombine.low %v481, %v485
      %v1282 = vcombine.low %v489, %v493
      %v1284 = vunpack.c.l.s4 1983009808
      %v1285 = vunpack.c.0.s8 %v1284
      %v1286 = vlaneseq
      %v1287 = vshrl.u32 %v1286, 7
      %v1288 = vsub.s32 %v1285, %v1287
      %v1289 = vrot.slane %v1281, %v1288
      %v1291 = vunpack.c.l.s4 1983009808
      %v1292 = vunpack.c.0.s8 %v1291
      %v1293 = vlaneseq
      %v1294 = vshrl.u32 %v1293, 7
      %v1295 = vsub.s32 %v1292, %v1294
      %v1296 = vrot.slane %v1282, %v1295
      %v1297 = vcombine.low %v1289, %v1296
      %v1298 = vcombine.low %v497, %v501
      %v1299 = vcombine.low %v505, %v509
      %v1301 = vunpack.c.l.s4 1983009808
      %v1302 = vunpack.c.0.s8 %v1301
      %v1303 = vlaneseq
      %v1304 = vshrl.u32 %v1303, 7
      %v1305 = vsub.s32 %v1302, %v1304
      %v1306 = vrot.slane %v1298, %v1305
      %v1308 = vunpack.c.l.s4 1983009808
      %v1309 = vunpack.c.0.s8 %v1308
      %v1310 = vlaneseq
      %v1311 = vshrl.u32 %v1310, 7
      %v1312 = vsub.s32 %v1309, %v1311
      %v1313 = vrot.slane %v1299, %v1312
      %v1314 = vcombine.low %v1306, %v1313
      %v1315 = vcombine.low %v513, %v517
      %v1316 = vcombine.low %v521, %v525
      %v1318 = vunpack.c.l.s4 1983009808
      %v1319 = vunpack.c.0.s8 %v1318
      %v1320 = vlaneseq
      %v1321 = vshrl.u32 %v1320, 7
      %v1322 = vsub.s32 %v1319, %v1321
      %v1323 = vrot.slane %v1315, %v1322
      %v1325 = vunpack.c.l.s4 1983009808
      %v1326 = vunpack.c.0.s8 %v1325
      %v1327 = vlaneseq
      %v1328 = vshrl.u32 %v1327, 7
      %v1329 = vsub.s32 %v1326, %v1328
      %v1330 = vrot.slane %v1316, %v1329
      %v1331 = vcombine.low %v1323, %v1330
      %v1332 = vcombine.low %v529, %v533
      %v1333 = vcombine.low %v537, %v541
      %v1335 = vunpack.c.l.s4 1983009808
      %v1336 = vunpack.c.0.s8 %v1335
      %v1337 = vlaneseq
      %v1338 = vshrl.u32 %v1337, 7
      %v1339 = vsub.s32 %v1336, %v1338
      %v1340 = vrot.slane %v1332, %v1339
      %v1342 = vunpack.c.l.s4 1983009808
      %v1343 = vunpack.c.0.s8 %v1342
      %v1344 = vlaneseq
      %v1345 = vshrl.u32 %v1344, 7
      %v1346 = vsub.s32 %v1343, %v1345
      %v1347 = vrot.slane %v1333, %v1346
      %v1348 = vcombine.low %v1340, %v1347
      %v1349 = vcombine.low %v545, %v549
      %v1350 = vcombine.low %v553, %v557
      %v1352 = vunpack.c.l.s4 1983009808
      %v1353 = vunpack.c.0.s8 %v1352
      %v1354 = vlaneseq
      %v1355 = vshrl.u32 %v1354, 7
      %v1356 = vsub.s32 %v1353, %v1355
      %v1357 = vrot.slane %v1349, %v1356
      %v1359 = vunpack.c.l.s4 1983009808
      %v1360 = vunpack.c.0.s8 %v1359
      %v1361 = vlaneseq
      %v1362 = vshrl.u32 %v1361, 7
      %v1363 = vsub.s32 %v1360, %v1362
      %v1364 = vrot.slane %v1350, %v1363
      %v1365 = vcombine.low %v1357, %v1364
      %v1366 = vcombine.low %v561, %v565
      %v1367 = vcombine.low %v569, %v573
      %v1369 = vunpack.c.l.s4 1983009808
      %v1370 = vunpack.c.0.s8 %v1369
      %v1371 = vlaneseq
      %v1372 = vshrl.u32 %v1371, 7
      %v1373 = vsub.s32 %v1370, %v1372
      %v1374 = vrot.slane %v1366, %v1373
      %v1376 = vunpack.c.l.s4 1983009808
      %v1377 = vunpack.c.0.s8 %v1376
      %v1378 = vlaneseq
      %v1379 = vshrl.u32 %v1378, 7
      %v1380 = vsub.s32 %v1377, %v1379
      %v1381 = vrot.slane %v1367, %v1380
      %v1382 = vcombine.low %v1374, %v1381
      %v1383 = vcombine.low %v577, %v581
      %v1384 = vcombine.low %v585, %v589
      %v1386 = vunpack.c.l.s4 1983009808
      %v1387 = vunpack.c.0.s8 %v1386
      %v1388 = vlaneseq
      %v1389 = vshrl.u32 %v1388, 7
      %v1390 = vsub.s32 %v1387, %v1389
      %v1391 = vrot.slane %v1383, %v1390
      %v1393 = vunpack.c.l.s4 1983009808
      %v1394 = vunpack.c.0.s8 %v1393
      %v1395 = vlaneseq
      %v1396 = vshrl.u32 %v1395, 7
      %v1397 = vsub.s32 %v1394, %v1396
      %v1398 = vrot.slane %v1384, %v1397
      %v1399 = vcombine.low %v1391, %v1398
      %v1400 = vcombine.low %v593, %v597
      %v1401 = vcombine.low %v601, %v605
      %v1403 = vunpack.c.l.s4 1983009808
      %v1404 = vunpack.c.0.s8 %v1403
      %v1405 = vlaneseq
      %v1406 = vshrl.u32 %v1405, 7
      %v1407 = vsub.s32 %v1404, %v1406
      %v1408 = vrot.slane %v1400, %v1407
      %v1410 = vunpack.c.l.s4 1983009808
      %v1411 = vunpack.c.0.s8 %v1410
      %v1412 = vlaneseq
      %v1413 = vshrl.u32 %v1412, 7
      %v1414 = vsub.s32 %v1411, %v1413
      %v1415 = vrot.slane %v1401, %v1414
      %v1416 = vcombine.low %v1408, %v1415
      %v1417 = vcombine.low %v609, %v613
      %v1418 = vcombine.low %v617, %v621
      %v1420 = vunpack.c.l.s4 1983009808
      %v1421 = vunpack.c.0.s8 %v1420
      %v1422 = vlaneseq
      %v1423 = vshrl.u32 %v1422, 7
      %v1424 = vsub.s32 %v1421, %v1423
      %v1425 = vrot.slane %v1417, %v1424
      %v1427 = vunpack.c.l.s4 1983009808
      %v1428 = vunpack.c.0.s8 %v1427
      %v1429 = vlaneseq
      %v1430 = vshrl.u32 %v1429, 7
      %v1431 = vsub.s32 %v1428, %v1430
      %v1432 = vrot.slane %v1418, %v1431
      %v1433 = vcombine.low %v1425, %v1432
      %v1434 = vcombine.low %v625, %v629
      %v1435 = vcombine.low %v633, %v637
      %v1437 = vunpack.c.l.s4 1983009808
      %v1438 = vunpack.c.0.s8 %v1437
      %v1439 = vlaneseq
      %v1440 = vshrl.u32 %v1439, 7
      %v1441 = vsub.s32 %v1438, %v1440
      %v1442 = vrot.slane %v1434, %v1441
      %v1444 = vunpack.c.l.s4 1983009808
      %v1445 = vunpack.c.0.s8 %v1444
      %v1446 = vlaneseq
      %v1447 = vshrl.u32 %v1446, 7
      %v1448 = vsub.s32 %v1445, %v1447
      %v1449 = vrot.slane %v1435, %v1448
      %v1450 = vcombine.low %v1442, %v1449
      %v1451 = vcombine.low %v641, %v645
      %v1452 = vcombine.low %v649, %v653
      %v1454 = vunpack.c.l.s4 1983009808
      %v1455 = vunpack.c.0.s8 %v1454
      %v1456 = vlaneseq
      %v1457 = vshrl.u32 %v1456, 7
      %v1458 = vsub.s32 %v1455, %v1457
      %v1459 = vrot.slane %v1451, %v1458
      %v1461 = vunpack.c.l.s4 1983009808
      %v1462 = vunpack.c.0.s8 %v1461
      %v1463 = vlaneseq
      %v1464 = vshrl.u32 %v1463, 7
      %v1465 = vsub.s32 %v1462, %v1464
      %v1466 = vrot.slane %v1452, %v1465
      %v1467 = vcombine.low %v1459, %v1466
      %v1468 = vcombine.low %v657, %v661
      %v1469 = vcombine.low %v665, %v669
      %v1471 = vunpack.c.l.s4 1983009808
      %v1472 = vunpack.c.0.s8 %v1471
      %v1473 = vlaneseq
      %v1474 = vshrl.u32 %v1473, 7
      %v1475 = vsub.s32 %v1472, %v1474
      %v1476 = vrot.slane %v1468, %v1475
      %v1478 = vunpack.c.l.s4 1983009808
      %v1479 = vunpack.c.0.s8 %v1478
      %v1480 = vlaneseq
      %v1481 = vshrl.u32 %v1480, 7
      %v1482 = vsub.s32 %v1479, %v1481
      %v1483 = vrot.slane %v1469, %v1482
      %v1484 = vcombine.low %v1476, %v1483
      %v1485 = vcombine.low %v673, %v677
      %v1486 = vcombine.low %v681, %v685
      %v1488 = vunpack.c.l.s4 1983009808
      %v1489 = vunpack.c.0.s8 %v1488
      %v1490 = vlaneseq
      %v1491 = vshrl.u32 %v1490, 7
      %v1492 = vsub.s32 %v1489, %v1491
      %v1493 = vrot.slane %v1485, %v1492
      %v1495 = vunpack.c.l.s4 1983009808
      %v1496 = vunpack.c.0.s8 %v1495
      %v1497 = vlaneseq
      %v1498 = vshrl.u32 %v1497, 7
      %v1499 = vsub.s32 %v1496, %v1498
      %v1500 = vrot.slane %v1486, %v1499
      %v1501 = vcombine.low %v1493, %v1500
      %v1502 = vcombine.low %v689, %v693
      %v1503 = vcombine.low %v697, %v701
      %v1505 = vunpack.c.l.s4 1983009808
      %v1506 = vunpack.c.0.s8 %v1505
      %v1507 = vlaneseq
      %v1508 = vshrl.u32 %v1507, 7
      %v1509 = vsub.s32 %v1506, %v1508
      %v1510 = vrot.slane %v1502, %v1509
      %v1512 = vunpack.c.l.s4 1983009808
      %v1513 = vunpack.c.0.s8 %v1512
      %v1514 = vlaneseq
      %v1515 = vshrl.u32 %v1514, 7
      %v1516 = vsub.s32 %v1513, %v1515
      %v1517 = vrot.slane %v1503, %v1516
      %v1518 = vcombine.low %v1510, %v1517
      %v1519 = vcombine.low %v705, %v709
      %v1520 = vcombine.low %v713, %v717
      %v1522 = vunpack.c.l.s4 1983009808
      %v1523 = vunpack.c.0.s8 %v1522
      %v1524 = vlaneseq
      %v1525 = vshrl.u32 %v1524, 7
      %v1526 = vsub.s32 %v1523, %v1525
      %v1527 = vrot.slane %v1519, %v1526
      %v1529 = vunpack.c.l.s4 1983009808
      %v1530 = vunpack.c.0.s8 %v1529
      %v1531 = vlaneseq
      %v1532 = vshrl.u32 %v1531, 7
      %v1533 = vsub.s32 %v1530, %v1532
      %v1534 = vrot.slane %v1520, %v1533
      %v1535 = vcombine.low %v1527, %v1534
      %v1536 = vcombine.low %v721, %v725
      %v1537 = vcombine.low %v729, %v733
      %v1539 = vunpack.c.l.s4 1983009808
      %v1540 = vunpack.c.0.s8 %v1539
      %v1541 = vlaneseq
      %v1542 = vshrl.u32 %v1541, 7
      %v1543 = vsub.s32 %v1540, %v1542
      %v1544 = vrot.slane %v1536, %v1543
      %v1546 = vunpack.c.l.s4 1983009808
      %v1547 = vunpack.c.0.s8 %v1546
      %v1548 = vlaneseq
      %v1549 = vshrl.u32 %v1548, 7
      %v1550 = vsub.s32 %v1547, %v1549
      %v1551 = vrot.slane %v1537, %v1550
      %v1552 = vcombine.low %v1544, %v1551
      %v1553 = vcombine.low %v737, %v741
      %v1554 = vcombine.low %v745, %v749
      %v1556 = vunpack.c.l.s4 1983009808
      %v1557 = vunpack.c.0.s8 %v1556
      %v1558 = vlaneseq
      %v1559 = vshrl.u32 %v1558, 7
      %v1560 = vsub.s32 %v1557, %v1559
      %v1561 = vrot.slane %v1553, %v1560
      %v1563 = vunpack.c.l.s4 1983009808
      %v1564 = vunpack.c.0.s8 %v1563
      %v1565 = vlaneseq
      %v1566 = vshrl.u32 %v1565, 7
      %v1567 = vsub.s32 %v1564, %v1566
      %v1568 = vrot.slane %v1554, %v1567
      %v1569 = vcombine.low %v1561, %v1568
      %v1570 = vcombine.low %v753, %v757
      %v1571 = vcombine.low %v761, %v765
      %v1573 = vunpack.c.l.s4 1983009808
      %v1574 = vunpack.c.0.s8 %v1573
      %v1575 = vlaneseq
      %v1576 = vshrl.u32 %v1575, 7
      %v1577 = vsub.s32 %v1574, %v1576
      %v1578 = vrot.slane %v1570, %v1577
      %v1580 = vunpack.c.l.s4 1983009808
      %v1581 = vunpack.c.0.s8 %v1580
      %v1582 = vlaneseq
      %v1583 = vshrl.u32 %v1582, 7
      %v1584 = vsub.s32 %v1581, %v1583
      %v1585 = vrot.slane %v1571, %v1584
      %v1586 = vcombine.low %v1578, %v1585
      %v1587 = vcombine.low %v769, %v773
      %v1588 = vcombine.low %v777, %v781
      %v1590 = vunpack.c.l.s4 1983009808
      %v1591 = vunpack.c.0.s8 %v1590
      %v1592 = vlaneseq
      %v1593 = vshrl.u32 %v1592, 7
      %v1594 = vsub.s32 %v1591, %v1593
      %v1595 = vrot.slane %v1587, %v1594
      %v1597 = vunpack.c.l.s4 1983009808
      %v1598 = vunpack.c.0.s8 %v1597
      %v1599 = vlaneseq
      %v1600 = vshrl.u32 %v1599, 7
      %v1601 = vsub.s32 %v1598, %v1600
      %v1602 = vrot.slane %v1588, %v1601
      %v1603 = vcombine.low %v1595, %v1602
      %v1604 = vcombine.low %v785, %v789
      %v1605 = vcombine.low %v793, %v797
      %v1607 = vunpack.c.l.s4 1983009808
      %v1608 = vunpack.c.0.s8 %v1607
      %v1609 = vlaneseq
      %v1610 = vshrl.u32 %v1609, 7
      %v1611 = vsub.s32 %v1608, %v1610
      %v1612 = vrot.slane %v1604, %v1611
      %v1614 = vunpack.c.l.s4 1983009808
      %v1615 = vunpack.c.0.s8 %v1614
      %v1616 = vlaneseq
      %v1617 = vshrl.u32 %v1616, 7
      %v1618 = vsub.s32 %v1615, %v1617
      %v1619 = vrot.slane %v1605, %v1618
      %v1620 = vcombine.low %v1612, %v1619
      %v1621 = vcombine.low %v801, %v805
      %v1622 = vcombine.low %v809, %v813
      %v1624 = vunpack.c.l.s4 1983009808
      %v1625 = vunpack.c.0.s8 %v1624
      %v1626 = vlaneseq
      %v1627 = vshrl.u32 %v1626, 7
      %v1628 = vsub.s32 %v1625, %v1627
      %v1629 = vrot.slane %v1621, %v1628
      %v1631 = vunpack.c.l.s4 1983009808
      %v1632 = vunpack.c.0.s8 %v1631
      %v1633 = vlaneseq
      %v1634 = vshrl.u32 %v1633, 7
      %v1635 = vsub.s32 %v1632, %v1634
      %v1636 = vrot.slane %v1622, %v1635
      %v1637 = vcombine.low %v1629, %v1636
      %v1638 = vcombine.low %v817, %v821
      %v1639 = vcombine.low %v825, %v829
      %v1641 = vunpack.c.l.s4 1983009808
      %v1642 = vunpack.c.0.s8 %v1641
      %v1643 = vlaneseq
      %v1644 = vshrl.u32 %v1643, 7
      %v1645 = vsub.s32 %v1642, %v1644
      %v1646 = vrot.slane %v1638, %v1645
      %v1648 = vunpack.c.l.s4 1983009808
      %v1649 = vunpack.c.0.s8 %v1648
      %v1650 = vlaneseq
      %v1651 = vshrl.u32 %v1650, 7
      %v1652 = vsub.s32 %v1649, %v1651
      %v1653 = vrot.slane %v1639, %v1652
      %v1654 = vcombine.low %v1646, %v1653
      %v1655 = vcombine.low %v833, %v837
      %v1656 = vcombine.low %v841, %v845
      %v1658 = vunpack.c.l.s4 1983009808
      %v1659 = vunpack.c.0.s8 %v1658
      %v1660 = vlaneseq
      %v1661 = vshrl.u32 %v1660, 7
      %v1662 = vsub.s32 %v1659, %v1661
      %v1663 = vrot.slane %v1655, %v1662
      %v1665 = vunpack.c.l.s4 1983009808
      %v1666 = vunpack.c.0.s8 %v1665
      %v1667 = vlaneseq
      %v1668 = vshrl.u32 %v1667, 7
      %v1669 = vsub.s32 %v1666, %v1668
      %v1670 = vrot.slane %v1656, %v1669
      %v1671 = vcombine.low %v1663, %v1670
      %v1672 = vcombine.low %v849, %v853
      %v1673 = vcombine.low %v857, %v861
      %v1675 = vunpack.c.l.s4 1983009808
      %v1676 = vunpack.c.0.s8 %v1675
      %v1677 = vlaneseq
      %v1678 = vshrl.u32 %v1677, 7
      %v1679 = vsub.s32 %v1676, %v1678
      %v1680 = vrot.slane %v1672, %v1679
      %v1682 = vunpack.c.l.s4 1983009808
      %v1683 = vunpack.c.0.s8 %v1682
      %v1684 = vlaneseq
      %v1685 = vshrl.u32 %v1684, 7
      %v1686 = vsub.s32 %v1683, %v1685
      %v1687 = vrot.slane %v1673, %v1686
      %v1688 = vcombine.low %v1680, %v1687
      %v1689 = vcombine.low %v865, %v869
      %v1690 = vcombine.low %v873, %v877
      %v1692 = vunpack.c.l.s4 1983009808
      %v1693 = vunpack.c.0.s8 %v1692
      %v1694 = vlaneseq
      %v1695 = vshrl.u32 %v1694, 7
      %v1696 = vsub.s32 %v1693, %v1695
      %v1697 = vrot.slane %v1689, %v1696
      %v1699 = vunpack.c.l.s4 1983009808
      %v1700 = vunpack.c.0.s8 %v1699
      %v1701 = vlaneseq
      %v1702 = vshrl.u32 %v1701, 7
      %v1703 = vsub.s32 %v1700, %v1702
      %v1704 = vrot.slane %v1690, %v1703
      %v1705 = vcombine.low %v1697, %v1704
      %v1706 = vcombine.low %v881, %v885
      %v1707 = vcombine.low %v889, %v893
      %v1709 = vunpack.c.l.s4 1983009808
      %v1710 = vunpack.c.0.s8 %v1709
      %v1711 = vlaneseq
      %v1712 = vshrl.u32 %v1711, 7
      %v1713 = vsub.s32 %v1710, %v1712
      %v1714 = vrot.slane %v1706, %v1713
      %v1716 = vunpack.c.l.s4 1983009808
      %v1717 = vunpack.c.0.s8 %v1716
      %v1718 = vlaneseq
      %v1719 = vshrl.u32 %v1718, 7
      %v1720 = vsub.s32 %v1717, %v1719
      %v1721 = vrot.slane %v1707, %v1720
      %v1722 = vcombine.low %v1714, %v1721
      %v1723 = vcombine.low %v897, %v901
      %v1724 = vcombine.low %v905, %v909
      %v1726 = vunpack.c.l.s4 1983009808
      %v1727 = vunpack.c.0.s8 %v1726
      %v1728 = vlaneseq
      %v1729 = vshrl.u32 %v1728, 7
      %v1730 = vsub.s32 %v1727, %v1729
      %v1731 = vrot.slane %v1723, %v1730
      %v1733 = vunpack.c.l.s4 1983009808
      %v1734 = vunpack.c.0.s8 %v1733
      %v1735 = vlaneseq
      %v1736 = vshrl.u32 %v1735, 7
      %v1737 = vsub.s32 %v1734, %v1736
      %v1738 = vrot.slane %v1724, %v1737
      %v1739 = vcombine.low %v1731, %v1738
      %v1740 = vcombine.low %v913, %v917
      %v1741 = vcombine.low %v921, %v925
      %v1743 = vunpack.c.l.s4 1983009808
      %v1744 = vunpack.c.0.s8 %v1743
      %v1745 = vlaneseq
      %v1746 = vshrl.u32 %v1745, 7
      %v1747 = vsub.s32 %v1744, %v1746
      %v1748 = vrot.slane %v1740, %v1747
      %v1750 = vunpack.c.l.s4 1983009808
      %v1751 = vunpack.c.0.s8 %v1750
      %v1752 = vlaneseq
      %v1753 = vshrl.u32 %v1752, 7
      %v1754 = vsub.s32 %v1751, %v1753
      %v1755 = vrot.slane %v1741, %v1754
      %v1756 = vcombine.low %v1748, %v1755
      %v1757 = vcombine.low %v929, %v933
      %v1758 = vcombine.low %v937, %v941
      %v1760 = vunpack.c.l.s4 1983009808
      %v1761 = vunpack.c.0.s8 %v1760
      %v1762 = vlaneseq
      %v1763 = vshrl.u32 %v1762, 7
      %v1764 = vsub.s32 %v1761, %v1763
      %v1765 = vrot.slane %v1757, %v1764
      %v1767 = vunpack.c.l.s4 1983009808
      %v1768 = vunpack.c.0.s8 %v1767
      %v1769 = vlaneseq
      %v1770 = vshrl.u32 %v1769, 7
      %v1771 = vsub.s32 %v1768, %v1770
      %v1772 = vrot.slane %v1758, %v1771
      %v1773 = vcombine.low %v1765, %v1772
      %v1774 = vcombine.low %v945, %v949
      %v1775 = vcombine.low %v953, %v957
      %v1777 = vunpack.c.l.s4 1983009808
      %v1778 = vunpack.c.0.s8 %v1777
      %v1779 = vlaneseq
      %v1780 = vshrl.u32 %v1779, 7
      %v1781 = vsub.s32 %v1778, %v1780
      %v1782 = vrot.slane %v1774, %v1781
      %v1784 = vunpack.c.l.s4 1983009808
      %v1785 = vunpack.c.0.s8 %v1784
      %v1786 = vlaneseq
      %v1787 = vshrl.u32 %v1786, 7
      %v1788 = vsub.s32 %v1785, %v1787
      %v1789 = vrot.slane %v1775, %v1788
      %v1790 = vcombine.low %v1782, %v1789
      %v1791 = vcombine.low %v961, %v965
      %v1792 = vcombine.low %v969, %v973
      %v1794 = vunpack.c.l.s4 1983009808
      %v1795 = vunpack.c.0.s8 %v1794
      %v1796 = vlaneseq
      %v1797 = vshrl.u32 %v1796, 7
      %v1798 = vsub.s32 %v1795, %v1797
      %v1799 = vrot.slane %v1791, %v1798
      %v1801 = vunpack.c.l.s4 1983009808
      %v1802 = vunpack.c.0.s8 %v1801
      %v1803 = vlaneseq
      %v1804 = vshrl.u32 %v1803, 7
      %v1805 = vsub.s32 %v1802, %v1804
      %v1806 = vrot.slane %v1792, %v1805
      %v1807 = vcombine.low %v1799, %v1806
      %v1808 = vcombine.low %v977, %v981
      %v1809 = vcombine.low %v985, %v989
      %v1811 = vunpack.c.l.s4 1983009808
      %v1812 = vunpack.c.0.s8 %v1811
      %v1813 = vlaneseq
      %v1814 = vshrl.u32 %v1813, 7
      %v1815 = vsub.s32 %v1812, %v1814
      %v1816 = vrot.slane %v1808, %v1815
      %v1818 = vunpack.c.l.s4 1983009808
      %v1819 = vunpack.c.0.s8 %v1818
      %v1820 = vlaneseq
      %v1821 = vshrl.u32 %v1820, 7
      %v1822 = vsub.s32 %v1819, %v1821
      %v1823 = vrot.slane %v1809, %v1822
      %v1824 = vcombine.low %v1816, %v1823
      %v1825 = vcombine.low %v993, %v997
      %v1826 = vcombine.low %v1001, %v1005
      %v1828 = vunpack.c.l.s4 1983009808
      %v1829 = vunpack.c.0.s8 %v1828
      %v1830 = vlaneseq
      %v1831 = vshrl.u32 %v1830, 7
      %v1832 = vsub.s32 %v1829, %v1831
      %v1833 = vrot.slane %v1825, %v1832
      %v1835 = vunpack.c.l.s4 1983009808
      %v1836 = vunpack.c.0.s8 %v1835
      %v1837 = vlaneseq
      %v1838 = vshrl.u32 %v1837, 7
      %v1839 = vsub.s32 %v1836, %v1838
      %v1840 = vrot.slane %v1826, %v1839
      %v1841 = vcombine.low %v1833, %v1840
      %v1842 = vcombine.low %v1009, %v1013
      %v1843 = vcombine.low %v1017, %v1021
      %v1845 = vunpack.c.l.s4 1983009808
      %v1846 = vunpack.c.0.s8 %v1845
      %v1847 = vlaneseq
      %v1848 = vshrl.u32 %v1847, 7
      %v1849 = vsub.s32 %v1846, %v1848
      %v1850 = vrot.slane %v1842, %v1849
      %v1852 = vunpack.c.l.s4 1983009808
      %v1853 = vunpack.c.0.s8 %v1852
      %v1854 = vlaneseq
      %v1855 = vshrl.u32 %v1854, 7
      %v1856 = vsub.s32 %v1853, %v1855
      %v1857 = vrot.slane %v1843, %v1856
      %v1858 = vcombine.low %v1850, %v1857
      %v1859 = vcombine.low %v1025, %v1029
      %v1860 = vcombine.low %v1033, %v1037
      %v1862 = vunpack.c.l.s4 1983009808
      %v1863 = vunpack.c.0.s8 %v1862
      %v1864 = vlaneseq
      %v1865 = vshrl.u32 %v1864, 7
      %v1866 = vsub.s32 %v1863, %v1865
      %v1867 = vrot.slane %v1859, %v1866
      %v1869 = vunpack.c.l.s4 1983009808
      %v1870 = vunpack.c.0.s8 %v1869
      %v1871 = vlaneseq
      %v1872 = vshrl.u32 %v1871, 7
      %v1873 = vsub.s32 %v1870, %v1872
      %v1874 = vrot.slane %v1860, %v1873
      %v1875 = vcombine.low %v1867, %v1874
      %v1876 = vcombine.low %v1041, %v1045
      %v1877 = vcombine.low %v1049, %v1053
      %v1879 = vunpack.c.l.s4 1983009808
      %v1880 = vunpack.c.0.s8 %v1879
      %v1881 = vlaneseq
      %v1882 = vshrl.u32 %v1881, 7
      %v1883 = vsub.s32 %v1880, %v1882
      %v1884 = vrot.slane %v1876, %v1883
      %v1886 = vunpack.c.l.s4 1983009808
      %v1887 = vunpack.c.0.s8 %v1886
      %v1888 = vlaneseq
      %v1889 = vshrl.u32 %v1888, 7
      %v1890 = vsub.s32 %v1887, %v1889
      %v1891 = vrot.slane %v1877, %v1890
      %v1892 = vcombine.low %v1884, %v1891
      %v1893 = vcombine.low %v1057, %v1061
      %v1894 = vcombine.low %v1065, %v1069
      %v1896 = vunpack.c.l.s4 1983009808
      %v1897 = vunpack.c.0.s8 %v1896
      %v1898 = vlaneseq
      %v1899 = vshrl.u32 %v1898, 7
      %v1900 = vsub.s32 %v1897, %v1899
      %v1901 = vrot.slane %v1893, %v1900
      %v1903 = vunpack.c.l.s4 1983009808
      %v1904 = vunpack.c.0.s8 %v1903
      %v1905 = vlaneseq
      %v1906 = vshrl.u32 %v1905, 7
      %v1907 = vsub.s32 %v1904, %v1906
      %v1908 = vrot.slane %v1894, %v1907
      %v1909 = vcombine.low %v1901, %v1908
      %v1910 = vcombine.low %v1073, %v1077
      %v1911 = vcombine.low %v1081, %v1085
      %v1913 = vunpack.c.l.s4 1983009808
      %v1914 = vunpack.c.0.s8 %v1913
      %v1915 = vlaneseq
      %v1916 = vshrl.u32 %v1915, 7
      %v1917 = vsub.s32 %v1914, %v1916
      %v1918 = vrot.slane %v1910, %v1917
      %v1920 = vunpack.c.l.s4 1983009808
      %v1921 = vunpack.c.0.s8 %v1920
      %v1922 = vlaneseq
      %v1923 = vshrl.u32 %v1922, 7
      %v1924 = vsub.s32 %v1921, %v1923
      %v1925 = vrot.slane %v1911, %v1924
      %v1926 = vcombine.low %v1918, %v1925
      %v1927 = vcombine.low %v1089, %v1093
      %v1929 = vunpack.c.l.s4 1983009808
      %v1930 = vunpack.c.0.s8 %v1929
      %v1931 = vlaneseq
      %v1932 = vshrl.u32 %v1931, 7
      %v1933 = vsub.s32 %v1930, %v1932
      %v1934 = vrot.slane %v1927, %v1933
      %v1985 = vmul.f32 %v202, %v1110
      %v1986 = vmul.f32 %v203, %v1127
      %v1987 = vmul.f32 %v204, %v1144
      %v1988 = vmul.f32 %v205, %v1161
      %v1989 = vmul.f32 %v206, %v1178
      %v1990 = vmul.f32 %v207, %v1195
      %v1991 = vmul.f32 %v208, %v1212
      %v1992 = vmul.f32 %v209, %v1229
      %v1993 = vmul.f32 %v210, %v1246
      %v1994 = vmul.f32 %v211, %v1263
      %v1995 = vmul.f32 %v212, %v1280
      %v1996 = vmul.f32 %v213, %v1297
      %v1997 = vmul.f32 %v214, %v1314
      %v1998 = vmul.f32 %v215, %v1331
      %v1999 = vmul.f32 %v216, %v1348
      %v2000 = vmul.f32 %v217, %v1365
      %v2001 = vmul.f32 %v218, %v1382
      %v2002 = vmul.f32 %v219, %v1399
      %v2003 = vmul.f32 %v220, %v1416
      %v2004 = vmul.f32 %v221, %v1433
      %v2005 = vmul.f32 %v222, %v1450
      %v2006 = vmul.f32 %v223, %v1467
      %v2007 = vmul.f32 %v224, %v1484
      %v2008 = vmul.f32 %v225, %v1501
      %v2009 = vmul.f32 %v226, %v1518
      %v2010 = vmul.f32 %v227, %v1535
      %v2011 = vmul.f32 %v228, %v1552
      %v2012 = vmul.f32 %v229, %v1569
      %v2013 = vmul.f32 %v230, %v1586
      %v2014 = vmul.f32 %v231, %v1603
      %v2015 = vmul.f32 %v232, %v1620
      %v2016 = vmul.f32 %v233, %v1637
      %v2017 = vmul.f32 %v234, %v1654
      %v2018 = vmul.f32 %v235, %v1671
      %v2019 = vmul.f32 %v236, %v1688
      %v2020 = vmul.f32 %v237, %v1705
      %v2021 = vmul.f32 %v238, %v1722
      %v2022 = vmul.f32 %v239, %v1739
      %v2023 = vmul.f32 %v240, %v1756
      %v2024 = vmul.f32 %v241, %v1773
      %v2025 = vmul.f32 %v242, %v1790
      %v2026 = vmul.f32 %v243, %v1807
      %v2027 = vmul.f32 %v244, %v1824
      %v2028 = vmul.f32 %v245, %v1841
      %v2029 = vmul.f32 %v246, %v1858
      %v2030 = vmul.f32 %v247, %v1875
      %v2031 = vmul.f32 %v248, %v1892
      %v2032 = vmul.f32 %v249, %v1909
      %v2033 = vmul.f32 %v250, %v1926
      %v2034 = vmul.f32 %v251, %v1934
      %2035 = vst [vmem:[%s200] sm:$0xff] %v1985
      %2036 = vst [vmem:[%s200 + $0x8] sm:$0xff] %v1986
      %2037 = vst [vmem:[%s200 + $0x10] sm:$0xff] %v1987
      %2038 = vst [vmem:[%s200 + $0x18] sm:$0xff] %v1988
      %2039 = vst [vmem:[%s200 + $0x20] sm:$0xff] %v1989
      %2040 = vst [vmem:[%s200 + $0x28] sm:$0xff] %v1990
      %2041 = vst [vmem:[%s200 + $0x30] sm:$0xff] %v1991
      %2042 = vst [vmem:[%s200 + $0x38] sm:$0xff] %v1992
      %2043 = vst [vmem:[%s200 + $0x40] sm:$0xff] %v1993
      %2044 = vst [vmem:[%s200 + $0x48] sm:$0xff] %v1994
      %2045 = vst [vmem:[%s200 + $0x50] sm:$0xff] %v1995
      %2046 = vst [vmem:[%s200 + $0x58] sm:$0xff] %v1996
      %2047 = vst [vmem:[%s200 + $0x60] sm:$0xff] %v1997
      %2048 = vst [vmem:[%s200 + $0x68] sm:$0xff] %v1998
      %2049 = vst [vmem:[%s200 + $0x70] sm:$0xff] %v1999
      %2050 = vst [vmem:[%s200 + $0x78] sm:$0xff] %v2000
      %2051 = vst [vmem:[%s200 + $0x80] sm:$0xff] %v2001
      %2052 = vst [vmem:[%s200 + $0x88] sm:$0xff] %v2002
      %2053 = vst [vmem:[%s200 + $0x90] sm:$0xff] %v2003
      %2054 = vst [vmem:[%s200 + $0x98] sm:$0xff] %v2004
      %2055 = vst [vmem:[%s200 + $0xa0] sm:$0xff] %v2005
      %2056 = vst [vmem:[%s200 + $0xa8] sm:$0xff] %v2006
      %2057 = vst [vmem:[%s200 + $0xb0] sm:$0xff] %v2007
      %2058 = vst [vmem:[%s200 + $0xb8] sm:$0xff] %v2008
      %2059 = vst [vmem:[%s200 + $0xc0] sm:$0xff] %v2009
      %2060 = vst [vmem:[%s200 + $0xc8] sm:$0xff] %v2010
      %2061 = vst [vmem:[%s200 + $0xd0] sm:$0xff] %v2011
      %2062 = vst [vmem:[%s200 + $0xd8] sm:$0xff] %v2012
      %2063 = vst [vmem:[%s200 + $0xe0] sm:$0xff] %v2013
      %2064 = vst [vmem:[%s200 + $0xe8] sm:$0xff] %v2014
      %2065 = vst [vmem:[%s200 + $0xf0] sm:$0xff] %v2015
      %2066 = vst [vmem:[%s200 + $0xf8] sm:$0xff] %v2016
      %2067 = vst [vmem:[%s200 + $0x100] sm:$0xff] %v2017
      %2068 = vst [vmem:[%s200 + $0x108] sm:$0xff] %v2018
      %2069 = vst [vmem:[%s200 + $0x110] sm:$0xff] %v2019
      %2070 = vst [vmem:[%s200 + $0x118] sm:$0xff] %v2020
      %2071 = vst [vmem:[%s200 + $0x120] sm:$0xff] %v2021
      %2072 = vst [vmem:[%s200 + $0x128] sm:$0xff] %v2022
      %2073 = vst [vmem:[%s200 + $0x130] sm:$0xff] %v2023
      %2074 = vst [vmem:[%s200 + $0x138] sm:$0xff] %v2024
      %2075 = vst [vmem:[%s200 + $0x140] sm:$0xff] %v2025
      %2076 = vst [vmem:[%s200 + $0x148] sm:$0xff] %v2026
      %2077 = vst [vmem:[%s200 + $0x150] sm:$0xff] %v2027
      %2078 = vst [vmem:[%s200 + $0x158] sm:$0xff] %v2028
      %2079 = vst [vmem:[%s200 + $0x160] sm:$0xff] %v2029
      %2080 = vst [vmem:[%s200 + $0x168] sm:$0xff] %v2030
      %2081 = vst [vmem:[%s200 + $0x170] sm:$0xff] %v2031
      %2082 = vst [vmem:[%s200 + $0x178] sm:$0xff] %v2032
      %2083 = vst [vmem:[%s200 + $0x180] sm:$0xff] %v2033
      %2084 = vst [vmem:[%s200 + $0x188] sm:$0xf] %v2034
      %s2085 = smul.u32 198, %s18
      %p2086 = scmp.lt.s32.totalorder %s17, 0
      %s2087 = scalar_select %p2086, %s17, 0
      %p2088 = scmp.lt.s32.totalorder %s2085, 395
      %s2089 = scalar_select %p2088, %s2085, 395
      %s2090 = smul.addr %s2087, 396
      %s2091 = sadd.s32 %s2089, %s2090
      %s2092 = smul.addr %s2091, 2
      %s2093 = scalar_lea.vmem %s2, %s2092
      // Predicated region
      $region29: #{feature_masking.1} parent=27 // pred_check
        %p2094 = pneg %p99
      $region30: #{feature_masking.1} parent=27 // pred_check_branch
        %2096 = sbr.rel (%p2094) target = $region32
      $region31: #{feature_masking.1} parent=27 // pred_region
        %s2097 = smul.u32 198, %s18
      $region32: #{feature_masking.1} parent=27 // pred_fallthru
        _
    $region28: #{feature_masking.1} parent=5 // pred_fallthru
      _
    %p2098 = scmp.le.s32.totalorder 2, %s8
    // Predicated region
    $region33: #{feature_masking.1} parent=5 // pred_check
      %p2099 = pneg %p2098
    $region34: #{feature_masking.1} parent=5 // pred_check_branch
      %2101 = sbr.rel (%p2099) target = $region36
    $region35: #{feature_masking.1} parent=5 // pred_region
      %s2102 = ssub.s32 %s8, 2
      // Predicated region
      $region37: #{feature_masking.1} parent=35 // pred_check
        %p2103 = pneg %p105
      $region38: #{feature_masking.1} parent=35 // pred_check_branch
        %2105 = sbr.rel (%p2103) target = $region40
      $region39: #{feature_masking.1} parent=35 // pred_region
        %s2106 = smul.u32 198, %s20
        %p2107 = scmp.lt.s32.totalorder %s19, 0
        %s2108 = scalar_select %p2107, %s19, 0
        %p2109 = scmp.lt.s32.totalorder %s2106, 395
        %s2110 = scalar_select %p2109, %s2106, 395
        %s2111 = smul.addr %s2108, 396
        %s2112 = sadd.s32 %s2110, %s2111
        %s2113 = smul.addr %s2112, 2
        %s2114 = scalar_lea.vmem %s2, %s2113
      $region40: #{feature_masking.1} parent=35 // pred_fallthru
        _
    $region36: #{feature_masking.1} parent=5 // pred_fallthru
      _
  $region6: #{feature_masking.1} parent=0 // loop_footer
    %s12 = sadd.s32 1, %s8
  $region7: #{feature_masking.1} parent=0 // loop_footer_branch
    %7 = sbr.rel target = $region3
  $region8: #{feature_masking.1} parent=0 // loop_exit
    _

</llo_original>
